<compile_context>
chip_gen: v7x
topology: tpu7x:2x2x1
jax: 0.10.0
libtpu: 0.0.40
codegen_flags: <defaults>
</compile_context>

<pallas_src>
import functools
import math

import jax
import jax.numpy as jnp
from jax import lax
from jax.experimental import pallas as pl
from jax.experimental.pallas import tpu as pltpu


def _global_attn_kernel(q_ref, m_ref, wc_ref, wq_ref, h_ref, a_ref):
    """One batch-chunk of GlobalAttention ('dot', no mask, no coverage).

    q_ref:  (Bb, T, D)  queries              (compute dtype)
    m_ref:  (Bb, S, D)  memory bank          (compute dtype)
    wc_ref: (D, D)      linear_out weight for the context half  (w_out[:, :D].T)
    wq_ref: (D, D)      linear_out weight for the query half    (w_out[:, D:].T)
    h_ref:  (T, Bb, D)  attn_h slab, already in [tgt, batch, dim] layout
    a_ref:  (T, Bb, S)  align slab, already in [tgt, batch, src] layout
    """
    Bb, T, D = q_ref.shape

    q = q_ref[...]
    m = m_ref[...]

    # scores: contract on D without materializing m^T:
    # (Bb, T, D) x (Bb, S, D) -> (Bb, T, S), f32 accumulation
    s = lax.dot_general(
        q, m,
        dimension_numbers=(((2,), (2,)), ((0,), (0,))),
        preferred_element_type=jnp.float32)

    # exact softmax over src_len in f32 (max-subtracted); the stored align
    # therefore sums to 1 like torch.nn.Softmax.
    s_max = jnp.max(s, axis=-1, keepdims=True)
    e = jnp.exp(s - s_max)
    p = e * (1.0 / jnp.sum(e, axis=-1, keepdims=True))

    # context: (Bb, T, S) x (Bb, S, D) -> (Bb, T, D); MXU operands in m's dtype
    c = lax.dot_general(
        p.astype(m.dtype), m,
        dimension_numbers=(((2,), (1,)), ((0,), (0,))),
        preferred_element_type=jnp.float32)

    # output projection without concat:  h = c @ Wc^T + q @ Wq^T, then tanh
    wdt = wc_ref.dtype
    c2 = c.reshape(Bb * T, D).astype(wdt)
    q2 = q.reshape(Bb * T, D).astype(wdt)
    h = (jnp.dot(c2, wc_ref[...], preferred_element_type=jnp.float32)
         + jnp.dot(q2, wq_ref[...], preferred_element_type=jnp.float32))
    h = jnp.tanh(h).reshape(Bb, T, D)

    # write outputs directly in [tgt_len, batch, ...] layout; last dims (D, S)
    # stay minor so the stores are lane-dense when D, S are multiples of 128.
    h_ref[...] = jnp.transpose(h, (1, 0, 2)).astype(h_ref.dtype)
    a_ref[...] = jnp.transpose(p, (1, 0, 2)).astype(a_ref.dtype)


def _vmem_capacity_bytes():
    try:
        return int(pltpu.get_tpu_info().vmem_capacity_bytes)
    except Exception:
        return 64 * 1024 * 1024   # conservative fallback (v7x per-core VMEM)


def _per_step_bytes(bb, T, S, D, in_bytes, out_bytes, align_bytes):
    """VMEM footprint of one grid step (double-buffered blocks + intermediates)."""
    blocks = 2 * (bb * T * D * in_bytes          # q block
                  + bb * S * D * in_bytes        # memory-bank block (dominant)
                  + T * bb * D * out_bytes       # attn_h output block
                  + T * bb * S * align_bytes)    # align output block
    weights = 2 * 2 * D * D * in_bytes           # Wc^T, Wq^T (double-buffered)
    interm = (2 * bb * T * S + bb * T * D) * 4   # scores/probs + context (f32)
    interm += T * bb * D * 4 + T * bb * S * 4    # transposed temporaries
    return blocks + weights + interm


def _pick_batch_block(B, T, S, D, in_bytes, out_bytes, align_bytes, vmem_cap):
    """Largest sublane-friendly batch block that fits the VMEM budget and, when
    possible, leaves >= 2 grid steps for DMA/compute overlap / megacore."""
    budget = int(0.4 * vmem_cap)
    cands = [bb for bb in range(8, B + 1, 8) if B % bb == 0]
    if B not in cands:
        cands.append(B)                     # bb == B is always layout-legal
    cands = sorted(set(cands))

    def fits(bb):
        return _per_step_bytes(bb, T, S, D, in_bytes, out_bytes, align_bytes) <= budget

    multi = [bb for bb in cands if fits(bb) and B // bb >= 2]
    if multi:
        return max(multi)
    fitting = [bb for bb in cands if fits(bb)]
    if fitting:
        return max(fitting)
    return min(cands)


def global_attention_dot(source, memory_bank, w_out, *, compute_dtype=None):
    """
    GlobalAttention forward, attn_type='dot', no coverage / memory_lengths.

    source:      [B, T, D]  (or [B, D] for the one-step path)
    memory_bank: [B, S, D]
    w_out:       [D, 2*D]   nn.Linear(2*dim, dim, bias=False).weight ([out, in])
    compute_dtype: optional MXU/HBM dtype (e.g. jnp.bfloat16); outputs stay in
                   the caller's input dtype, accumulation/softmax stay f32.

    Returns (attn_h [T, B, D], align [T, B, S]) — or ([B, D], [B, S]) when the
    query is a single step — matching the PyTorch module.
    """
    one_step = source.ndim == 2
    if one_step:
        source = source[:, None, :]

    B, T, D = source.shape
    _, S, _ = memory_bank.shape
    assert memory_bank.shape == (B, S, D)
    assert w_out.shape == (D, 2 * D)

    out_dtype = source.dtype
    if compute_dtype is not None and jnp.dtype(compute_dtype) != jnp.dtype(source.dtype):
        source = source.astype(compute_dtype)
        memory_bank = memory_bank.astype(compute_dtype)
        w_out_c = w_out.astype(compute_dtype)
    else:
        w_out_c = w_out

    # concat([c, q]) @ w_out^T  ==  c @ w_out[:, :D]^T + q @ w_out[:, D:]^T
    wc_t = jnp.transpose(w_out_c[:, :D])    # (D, D)
    wq_t = jnp.transpose(w_out_c[:, D:])    # (D, D)

    in_bytes = jnp.dtype(source.dtype).itemsize
    out_bytes = jnp.dtype(out_dtype).itemsize
    align_bytes = jnp.dtype(out_dtype).itemsize

    vmem_cap = _vmem_capacity_bytes()
    Bb = _pick_batch_block(B, T, S, D, in_bytes, out_bytes, align_bytes, vmem_cap)
    grid = (B // Bb,)

    # scoped-VMEM budget: real working set * 1.25, clamped to ~85% of physical
    work = _per_step_bytes(Bb, T, S, D, in_bytes, out_bytes, align_bytes)
    vmem_limit = int(min(max(work * 5 // 4, 32 * 1024 * 1024), (vmem_cap * 85) // 100))

    # advisory cost estimate for XLA scheduling around the custom call
    flops = 4 * B * T * S * D + 4 * B * T * D * D
    transcendentals = B * T * (S + D + 1)
    bytes_accessed = ((B * T * D + B * S * D) * in_bytes
                      + 2 * D * D * in_bytes
                      + B * T * D * out_bytes
                      + B * T * S * align_bytes)
    cost = pl.CostEstimate(flops=flops,
                           transcendentals=transcendentals,
                           bytes_accessed=bytes_accessed)

    grid_spec = pltpu.PrefetchScalarGridSpec(
        num_scalar_prefetch=0,
        grid=grid,
        in_specs=[
            pl.BlockSpec((Bb, T, D), lambda b: (b, 0, 0)),
            pl.BlockSpec((Bb, S, D), lambda b: (b, 0, 0)),
            pl.BlockSpec((D, D), lambda b: (0, 0)),       # grid-invariant Wc^T
            pl.BlockSpec((D, D), lambda b: (0, 0)),       # grid-invariant Wq^T
        ],
        out_specs=[
            pl.BlockSpec((T, Bb, D), lambda b: (0, b, 0)),
            pl.BlockSpec((T, Bb, S), lambda b: (0, b, 0)),
        ],
    )

    attn_h, align = pl.pallas_call(
        _global_attn_kernel,
        out_shape=(
            jax.ShapeDtypeStruct((T, B, D), out_dtype),
            jax.ShapeDtypeStruct((T, B, S), out_dtype),
        ),
        grid_spec=grid_spec,
        compiler_params=pltpu.CompilerParams(
            dimension_semantics=("parallel",),
            vmem_limit_bytes=vmem_limit),
        cost_estimate=cost,
    )(source, memory_bank, wc_t, wq_t)

    if one_step:
        return attn_h[0], align[0]
    return attn_h, align


def _reference(source, memory_bank, w_out):
    # pure-JAX reference mirroring the PyTorch forward ('dot' attention),
    # computed at HIGHEST matmul precision so it is a trustworthy baseline.
    hp = jax.lax.Precision.HIGHEST
    align = jnp.einsum('btd,bsd->bts', source, memory_bank, precision=hp)
    p = jax.nn.softmax(align, axis=-1)
    c = jnp.einsum('bts,bsd->btd', p, memory_bank, precision=hp)
    concat = jnp.concatenate([c, source], axis=-1)
    attn_h = jnp.tanh(jnp.einsum('btk,dk->btd', concat, w_out, precision=hp))
    return jnp.transpose(attn_h, (1, 0, 2)), jnp.transpose(p, (1, 0, 2))


if __name__ == "__main__":
    key = jax.random.PRNGKey(0)
    k1, k2, k3 = jax.random.split(key, 3)

    # tile-aligned shapes (D, S multiples of 128; T multiple of 8).
    # B=16 -> the working-set/pipeline-aware selector picks Bb=8, grid=(2,).
    batch, tgt_len, src_len, dim = 16, 8, 128, 128

    # modest input scale keeps the softmax out of the saturated regime, so the
    # comparison is insensitive to the backend's internal matmul precision mode.
    source = 0.25 * jax.random.normal(k1, (batch, tgt_len, dim), dtype=jnp.float32)
    memory_bank = 0.25 * jax.random.normal(k2, (batch, src_len, dim), dtype=jnp.float32)
    # nn.Linear(2*dim, dim, bias=False).weight has shape [dim, 2*dim]
    bound = 1.0 / math.sqrt(2.0 * dim)
    w_out = jax.random.uniform(k3, (dim, 2 * dim), dtype=jnp.float32,
                               minval=-bound, maxval=bound)

    attn_h, align = jax.jit(global_attention_dot)(source, memory_bank, w_out)
    jax.block_until_ready((attn_h, align))

    ref_h, ref_a = _reference(source, memory_bank, w_out)
    assert attn_h.shape == (tgt_len, batch, dim)
    assert align.shape == (tgt_len, batch, src_len)
    assert jnp.allclose(attn_h, ref_h, atol=5e-3, rtol=5e-3), \
        float(jnp.max(jnp.abs(attn_h - ref_h)))
    assert jnp.allclose(align, ref_a, atol=5e-3, rtol=5e-3), \
        float(jnp.max(jnp.abs(align - ref_a)))
    # exact softmax: the returned attention distribution sums to 1
    assert jnp.allclose(jnp.sum(align, axis=-1), 1.0, atol=1e-3)

    # bf16-fed MXU / HBM path (perf mode): verify it runs and stays sane.
    h_bf, a_bf = jax.jit(
        functools.partial(global_attention_dot, compute_dtype=jnp.bfloat16)
    )(source, memory_bank, w_out)
    jax.block_until_ready((h_bf, a_bf))
    assert h_bf.shape == attn_h.shape and a_bf.shape == align.shape
    assert bool(jnp.all(jnp.isfinite(h_bf))) and bool(jnp.all(jnp.isfinite(a_bf)))

    print("KERNEL_OK")
</pallas_src>

<mosaic_0001>
module attributes {stable_mosaic.version = 11 : i64} {
  func.func @_global_attn_kernel(%arg0: i32, %arg1: memref<8x8x128xf32, #tpu.memory_space<vmem>>, %arg2: memref<8x128x128xf32, #tpu.memory_space<vmem>>, %arg3: memref<128x128xf32, #tpu.memory_space<vmem>>, %arg4: memref<128x128xf32, #tpu.memory_space<vmem>>, %arg5: memref<8x8x128xf32, #tpu.memory_space<vmem>>, %arg6: memref<8x8x128xf32, #tpu.memory_space<vmem>>) attributes {dimension_semantics = [#tpu.dimension_semantics<parallel>], iteration_bounds = array<i64: 2>, scalar_prefetch = 0 : i64, scratch_operands = 0 : i64, tpu.core_type = #tpu.core_type<tc>, window_params = [{transform_indices = @transform_0, window_bounds = array<i64: 8, 8, 128>}, {transform_indices = @transform_1, window_bounds = array<i64: 8, 128, 128>}, {pipeline_mode = #tpu.pipeline_mode<synchronous>, transform_indices = @transform_2, window_bounds = array<i64: 128, 128>}, {pipeline_mode = #tpu.pipeline_mode<synchronous>, transform_indices = @transform_3, window_bounds = array<i64: 128, 128>}, {transform_indices = @transform_4, window_bounds = array<i64: 8, 8, 128>}, {transform_indices = @transform_5, window_bounds = array<i64: 8, 8, 128>}]} {
    %c0 = arith.constant 0 : index
    %c0_0 = arith.constant 0 : index
    %c0_1 = arith.constant 0 : index
    %0 = vector.load %arg1[%c0, %c0_0, %c0_1] : memref<8x8x128xf32, #tpu.memory_space<vmem>>, vector<8x8x128xf32>
    %c0_2 = arith.constant 0 : index
    %c0_3 = arith.constant 0 : index
    %c0_4 = arith.constant 0 : index
    %1 = vector.load %arg2[%c0_2, %c0_3, %c0_4] : memref<8x128x128xf32, #tpu.memory_space<vmem>>, vector<8x128x128xf32>
    %cst = arith.constant dense<0.000000e+00> : vector<8x8x128xf32>
    %2 = tpu.matmul %0, %1, %cst {dimension_numbers = #tpu.dot_dimension_numbers<[2], [2], [1], [1], [0, 0, 0, 1, 1, 1], [0], [0]>} : vector<8x8x128xf32>, vector<8x128x128xf32>, vector<8x8x128xf32> -> vector<8x8x128xf32>
    %cst_5 = arith.constant dense<0xFF800000> : vector<8x8xf32>
    %3 = vector.multi_reduction <maximumf>, %2, %cst_5 [2] : vector<8x8x128xf32> to vector<8x8xf32>
    %4 = vector.shape_cast %3 : vector<8x8xf32> to vector<8x8x1xf32>
    %5 = vector.broadcast %4 : vector<8x8x1xf32> to vector<8x8x128xf32>
    %6 = arith.subf %2, %5 : vector<8x8x128xf32>
    %7 = math.exp %6 : vector<8x8x128xf32>
    %cst_6 = arith.constant dense<0.000000e+00> : vector<8x8xf32>
    %8 = vector.multi_reduction <add>, %7, %cst_6 [2] : vector<8x8x128xf32> to vector<8x8xf32>
    %9 = vector.shape_cast %8 : vector<8x8xf32> to vector<8x8x1xf32>
    %cst_7 = arith.constant 1.000000e+00 : f32
    %10 = vector.broadcast %cst_7 : f32 to vector<8x8x1xf32>
    %11 = arith.divf %10, %9 : vector<8x8x1xf32>
    %12 = vector.broadcast %11 : vector<8x8x1xf32> to vector<8x8x128xf32>
    %13 = arith.mulf %7, %12 : vector<8x8x128xf32>
    %cst_8 = arith.constant dense<0.000000e+00> : vector<8x8x128xf32>
    %14 = tpu.matmul %13, %1, %cst_8 {dimension_numbers = #tpu.dot_dimension_numbers<[2], [1], [1], [2], [0, 0, 0, 1, 1, 2], [0], [0]>} : vector<8x8x128xf32>, vector<8x128x128xf32>, vector<8x8x128xf32> -> vector<8x8x128xf32>
    %15 = vector.shape_cast %14 : vector<8x8x128xf32> to vector<64x128xf32>
    %16 = vector.shape_cast %0 : vector<8x8x128xf32> to vector<64x128xf32>
    %c0_9 = arith.constant 0 : index
    %c0_10 = arith.constant 0 : index
    %17 = vector.load %arg3[%c0_9, %c0_10] : memref<128x128xf32, #tpu.memory_space<vmem>>, vector<128x128xf32>
    %cst_11 = arith.constant dense<0.000000e+00> : vector<64x128xf32>
    %18 = tpu.matmul %15, %17, %cst_11 {dimension_numbers = #tpu.dot_dimension_numbers<[1], [0], [0], [1], [0, 0, 1, 1], [], []>} : vector<64x128xf32>, vector<128x128xf32>, vector<64x128xf32> -> vector<64x128xf32>
    %c0_12 = arith.constant 0 : index
    %c0_13 = arith.constant 0 : index
    %19 = vector.load %arg4[%c0_12, %c0_13] : memref<128x128xf32, #tpu.memory_space<vmem>>, vector<128x128xf32>
    %cst_14 = arith.constant dense<0.000000e+00> : vector<64x128xf32>
    %20 = tpu.matmul %16, %19, %cst_14 {dimension_numbers = #tpu.dot_dimension_numbers<[1], [0], [0], [1], [0, 0, 1, 1], [], []>} : vector<64x128xf32>, vector<128x128xf32>, vector<64x128xf32> -> vector<64x128xf32>
    %21 = arith.addf %18, %20 : vector<64x128xf32>
    %22 = math.tanh %21 : vector<64x128xf32>
    %23 = vector.shape_cast %22 : vector<64x128xf32> to vector<8x8x128xf32>
    %24 = tpu.transpose %23, [1, 0, 2] : vector<8x8x128xf32> -> vector<8x8x128xf32>
    %c0_15 = arith.constant 0 : index
    %c0_16 = arith.constant 0 : index
    %c0_17 = arith.constant 0 : index
    %25 = vector.load %arg5[%c0_15, %c0_16, %c0_17] : memref<8x8x128xf32, #tpu.memory_space<vmem>>, vector<8x8x128xf32>
    tpu.vector_store %arg5[%c0_15, %c0_16, %c0_17], %24 {strides = array<i32>} : memref<8x8x128xf32, #tpu.memory_space<vmem>>, vector<8x8x128xf32>,
    %26 = tpu.transpose %13, [1, 0, 2] : vector<8x8x128xf32> -> vector<8x8x128xf32>
    %c0_18 = arith.constant 0 : index
    %c0_19 = arith.constant 0 : index
    %c0_20 = arith.constant 0 : index
    %27 = vector.load %arg6[%c0_18, %c0_19, %c0_20] : memref<8x8x128xf32, #tpu.memory_space<vmem>>, vector<8x8x128xf32>
    tpu.vector_store %arg6[%c0_18, %c0_19, %c0_20], %26 {strides = array<i32>} : memref<8x8x128xf32, #tpu.memory_space<vmem>>, vector<8x8x128xf32>,
    return
  }
  func.func @transform_0(%arg0: i32) -> (i32, i32, i32) {
    %c0_i32 = arith.constant 0 : i32
    %c0_i32_0 = arith.constant 0 : i32
    %c0_i32_1 = arith.constant 0 : i32
    return %arg0, %c0_i32, %c0_i32_0 : i32, i32, i32
  }
  func.func @transform_1(%arg0: i32) -> (i32, i32, i32) {
    %c0_i32 = arith.constant 0 : i32
    %c0_i32_0 = arith.constant 0 : i32
    %c0_i32_1 = arith.constant 0 : i32
    return %arg0, %c0_i32, %c0_i32_0 : i32, i32, i32
  }
  func.func @transform_2(%arg0: i32) -> (i32, i32) {
    %c0_i32 = arith.constant 0 : i32
    %c0_i32_0 = arith.constant 0 : i32
    %c0_i32_1 = arith.constant 0 : i32
    return %c0_i32, %c0_i32_0 : i32, i32
  }
  func.func @transform_3(%arg0: i32) -> (i32, i32) {
    %c0_i32 = arith.constant 0 : i32
    %c0_i32_0 = arith.constant 0 : i32
    %c0_i32_1 = arith.constant 0 : i32
    return %c0_i32, %c0_i32_0 : i32, i32
  }
  func.func @transform_4(%arg0: i32) -> (i32, i32, i32) {
    %c0_i32 = arith.constant 0 : i32
    %c0_i32_0 = arith.constant 0 : i32
    %c0_i32_1 = arith.constant 0 : i32
    return %c0_i32, %arg0, %c0_i32_0 : i32, i32, i32
  }
  func.func @transform_5(%arg0: i32) -> (i32, i32, i32) {
    %c0_i32 = arith.constant 0 : i32
    %c0_i32_0 = arith.constant 0 : i32
    %c0_i32_1 = arith.constant 0 : i32
    return %c0_i32, %arg0, %c0_i32_0 : i32, i32, i32
  }
}

</mosaic_0001>

<llo_original>
// kernel: global_attention_dot.1
$region0: #{global_attention_dot.1}
  #allocation0 [shape = 'u32[]', space=smem, size = 0x4, offset = 0x4, fixed_abs, tag = 'smem constant byte address 0x4 - core index']
  #allocation1 [shape = 'u32[144,128]{1,0:T(1,128)}', space=vmem, size = 0x12000, scoped, tag = 'internal scratch']
  %s0 = inlined_call_operand.vmem [shape: f32[16,8,128], index: 0, kind: input, shape index: {}]
  %s1 = inlined_call_operand.hbm [shape: f32[16,128,128], index: 1, kind: input, shape index: {}]
  %s2 = inlined_call_operand.vmem [shape: f32[128,128], index: 2, kind: input, shape index: {}]
  %s3 = inlined_call_operand.vmem [shape: f32[128,128], index: 3, kind: input, shape index: {}]
  %s4 = inlined_call_operand.hbm [shape: f32[8,16,128], index: 4, kind: output, shape index: {0}]
  %s5 = inlined_call_operand.hbm [shape: f32[8,16,128], index: 5, kind: output, shape index: {1}]
  %6 = xla_tuple %s4, %s5
  %s7 = sld [smem:[#allocation0]]
  $region61: #{global_attention_dot.1} parent=0
    _
  %s9 = ssub.s32 1, %s7
  %s10 = scalar_select 0, %s9, %s7
  $region1: #{global_attention_dot.1} parent=0
    #allocation2 [shape = 'u8[1048576]{0}', space=vmem, size = 0x100000, scoped, tag = 'input window, operand 1']
    #allocation3 [shape = 's32[2]{0}', space=sflag, size = 0x8, scoped, tag = 'scoped memory for global_attention_dot.1']
    #allocation4 [shape = 's32[2]{0}', space=sflag, size = 0x8, scoped, tag = 'scoped memory for global_attention_dot.1']
    #allocation5 [shape = 'u8[65536]{0}', space=vmem, size = 0x10000, scoped, tag = 'output window, operand 0']
    #allocation6 [shape = 'u8[65536]{0}', space=vmem, size = 0x10000, scoped, tag = 'output window, operand 1']
    #allocation7 [shape = 's32[2]{0}', space=sflag, size = 0x8, scoped, tag = 'scoped memory for global_attention_dot.1']
    %11 = vsyncpa [#allocation3], 0
    %s12 = scalar_lea.sflag [#allocation3], 1
    %13 = vsyncpa %s12, 0
    %14 = vsyncpa [#allocation4], 0
    %s15 = scalar_lea.sflag [#allocation4], 1
    %16 = vsyncpa %s15, 0
    %17 = vsyncpa [#allocation7], 0
    %s18 = scalar_lea.sflag [#allocation7], 1
    %19 = vsyncpa %s18, 0
    loop: start=0, step=1, limit=4
    $region2: #{global_attention_dot.1} parent=1 // loop_pre_header
      _
    $region3: #{global_attention_dot.1} parent=1 // loop_header
      %s21 = sphi 0, %s25
      %p22 = scmp.ge.s32.totalorder %s21, 4
      %s31 = sphi 0, %s33
      %s34 = sphi 0, %s31
      %s35 = sphi 0, %s34
      %s51 = sphi 0, %s35
      %s57 = sphi 0, %s59
      %s60 = sphi 0, %s57
      %s61 = sphi 0, %s60
      %s77 = sphi 0, %s61
      %s81 = sphi 0, %s81
      %s83 = sphi 0, %s81
      %s84 = sphi 0, %s83
      %s98 = sphi 0, %s84
      %s102 = sphi 0, %s102
      %s104 = sphi 0, %s102
      %s105 = sphi 0, %s104
      %s119 = sphi 0, %s105
      %s125 = sphi 0, %s127
      %s128 = sphi 0, %s125
      %s129 = sphi 0, %s128
      %s145 = sphi 0, %s129
      %s151 = sphi 0, %s153
      %s154 = sphi 0, %s151
      %s155 = sphi 0, %s154
      %s171 = sphi 0, %s155
    $region4: #{global_attention_dot.1} parent=1 // loop_header_branch
      %24 = sbr.rel (%p22) target = $region8
    $region5: #{global_attention_dot.1} parent=1 // loop_body
      %s26 = ssub.s32 %s21, 1
      %s27 = ssub.s32 %s21, 2
      %s28 = sadd.s32 %s21, 1
      %s29 = ssub.s32 %s21, %s28
      %p30 = scmp.eq.s32.totalorder %s29, 0
      %s32 = sadd.s32 %s31, 1
      %s33 = scalar_select %p30, %s31, %s32
      %p36 = pneg %p30
      %p37 = scmp.eq.s32.totalorder %s21, 1
      %p38 = por %p36, %p37
      %p39 = scmp.ne.s32.totalorder %s31, %s34
      %p40 = scmp.eq.s32.totalorder %s21, 0
      %p41 = por %p39, %p40
      %p42 = scmp.ne.s32.totalorder %s31, %s34
      %p43 = scmp.eq.s32.totalorder %s26, 1
      %p44 = por %p42, %p43
      %p45 = scmp.ne.s32.totalorder %s34, %s35
      %p46 = scmp.eq.s32.totalorder %s26, 0
      %p47 = por %p45, %p46
      %p48 = scmp.ne.s32.totalorder %s34, %s35
      %p49 = scmp.eq.s32.totalorder %s27, 1
      %p50 = por %p48, %p49
      %p52 = scmp.ne.s32.totalorder %s35, %s51
      %p53 = scmp.eq.s32.totalorder %s27, 0
      %p54 = por %p52, %p53
      %s55 = ssub.s32 %s21, %s28
      %p56 = scmp.eq.s32.totalorder %s55, 0
      %s58 = sadd.s32 %s57, 1
      %s59 = scalar_select %p56, %s57, %s58
      %p62 = pneg %p56
      %p63 = scmp.eq.s32.totalorder %s21, 1
      %p64 = por %p62, %p63
      %p65 = scmp.ne.s32.totalorder %s57, %s60
      %p66 = scmp.eq.s32.totalorder %s21, 0
      %p67 = por %p65, %p66
      %p68 = scmp.ne.s32.totalorder %s57, %s60
      %p69 = scmp.eq.s32.totalorder %s26, 1
      %p70 = por %p68, %p69
      %p71 = scmp.ne.s32.totalorder %s60, %s61
      %p72 = scmp.eq.s32.totalorder %s26, 0
      %p73 = por %p71, %p72
      %p74 = scmp.ne.s32.totalorder %s60, %s61
      %p75 = scmp.eq.s32.totalorder %s27, 1
      %p76 = por %p74, %p75
      %p78 = scmp.ne.s32.totalorder %s61, %s77
      %p79 = scmp.eq.s32.totalorder %s27, 0
      %p80 = por %p78, %p79
      %s82 = sadd.s32 %s81, 1
      %p85 = scmp.eq.s32.totalorder %s21, 1
      %p86 = scmp.ne.s32.totalorder %s81, %s83
      %p87 = scmp.eq.s32.totalorder %s21, 0
      %p88 = por %p86, %p87
      %p89 = scmp.ne.s32.totalorder %s81, %s83
      %p90 = scmp.eq.s32.totalorder %s26, 1
      %p91 = por %p89, %p90
      %p92 = scmp.ne.s32.totalorder %s83, %s84
      %p93 = scmp.eq.s32.totalorder %s26, 0
      %p94 = por %p92, %p93
      %p95 = scmp.ne.s32.totalorder %s83, %s84
      %p96 = scmp.eq.s32.totalorder %s27, 1
      %p97 = por %p95, %p96
      %p99 = scmp.ne.s32.totalorder %s84, %s98
      %p100 = scmp.eq.s32.totalorder %s27, 0
      %p101 = por %p99, %p100
      %s103 = sadd.s32 %s102, 1
      %p106 = scmp.eq.s32.totalorder %s21, 1
      %p107 = scmp.ne.s32.totalorder %s102, %s104
      %p108 = scmp.eq.s32.totalorder %s21, 0
      %p109 = por %p107, %p108
      %p110 = scmp.ne.s32.totalorder %s102, %s104
      %p111 = scmp.eq.s32.totalorder %s26, 1
      %p112 = por %p110, %p111
      %p113 = scmp.ne.s32.totalorder %s104, %s105
      %p114 = scmp.eq.s32.totalorder %s26, 0
      %p115 = por %p113, %p114
      %p116 = scmp.ne.s32.totalorder %s104, %s105
      %p117 = scmp.eq.s32.totalorder %s27, 1
      %p118 = por %p116, %p117
      %p120 = scmp.ne.s32.totalorder %s105, %s119
      %p121 = scmp.eq.s32.totalorder %s27, 0
      %p122 = por %p120, %p121
      %s123 = ssub.s32 %s21, %s28
      %p124 = scmp.eq.s32.totalorder %s123, 0
      %s126 = sadd.s32 %s125, 1
      %s127 = scalar_select %p124, %s125, %s126
      %p130 = pneg %p124
      %p131 = scmp.eq.s32.totalorder %s21, 1
      %p132 = por %p130, %p131
      %p133 = scmp.ne.s32.totalorder %s125, %s128
      %p134 = scmp.eq.s32.totalorder %s21, 0
      %p135 = por %p133, %p134
      %p136 = scmp.ne.s32.totalorder %s125, %s128
      %p137 = scmp.eq.s32.totalorder %s26, 1
      %p138 = por %p136, %p137
      %p139 = scmp.ne.s32.totalorder %s128, %s129
      %p140 = scmp.eq.s32.totalorder %s26, 0
      %p141 = por %p139, %p140
      %p142 = scmp.ne.s32.totalorder %s128, %s129
      %p143 = scmp.eq.s32.totalorder %s27, 1
      %p144 = por %p142, %p143
      %p146 = scmp.ne.s32.totalorder %s129, %s145
      %p147 = scmp.eq.s32.totalorder %s27, 0
      %p148 = por %p146, %p147
      %s149 = ssub.s32 %s21, %s28
      %p150 = scmp.eq.s32.totalorder %s149, 0
      %s152 = sadd.s32 %s151, 1
      %s153 = scalar_select %p150, %s151, %s152
      %p156 = pneg %p150
      %p157 = scmp.eq.s32.totalorder %s21, 1
      %p158 = por %p156, %p157
      %p159 = scmp.ne.s32.totalorder %s151, %s154
      %p160 = scmp.eq.s32.totalorder %s21, 0
      %p161 = por %p159, %p160
      %p162 = scmp.ne.s32.totalorder %s151, %s154
      %p163 = scmp.eq.s32.totalorder %s26, 1
      %p164 = por %p162, %p163
      %p165 = scmp.ne.s32.totalorder %s154, %s155
      %p166 = scmp.eq.s32.totalorder %s26, 0
      %p167 = por %p165, %p166
      %p168 = scmp.ne.s32.totalorder %s154, %s155
      %p169 = scmp.eq.s32.totalorder %s27, 1
      %p170 = por %p168, %p169
      %p172 = scmp.ne.s32.totalorder %s155, %s171
      %p173 = scmp.eq.s32.totalorder %s27, 0
      %p174 = por %p172, %p173
      %p175 = scmp.le.s32.totalorder 1, %s21
      %p176 = scmp.lt.s32.totalorder %s21, 3
      %p177 = pnand %p175, %p176
      %p178 = pneg %p177
      // Predicated region
      $region9: #{global_attention_dot.1} parent=5 // pred_check
        _
      $region10: #{global_attention_dot.1} parent=5 // pred_check_branch
        %180 = sbr.rel (%p177) target = $region12
      $region11: #{global_attention_dot.1} parent=5 // pred_region
        %s181 = ssub.s32 %s21, 1
        // Predicated region
        $region13: #{global_attention_dot.1} parent=11 // pred_check
          %p182 = pneg %p94
        $region14: #{global_attention_dot.1} parent=11 // pred_check_branch
          %184 = sbr.rel (%p182) target = $region16
        $region15: #{global_attention_dot.1} parent=11 // pred_region
          _
        $region16: #{global_attention_dot.1} parent=11 // pred_fallthru
          _
        // Predicated region
        $region17: #{global_attention_dot.1} parent=11 // pred_check
          %p185 = pneg %p115
        $region18: #{global_attention_dot.1} parent=11 // pred_check_branch
          %187 = sbr.rel (%p185) target = $region20
        $region19: #{global_attention_dot.1} parent=11 // pred_region
          _
        $region20: #{global_attention_dot.1} parent=11 // pred_fallthru
          _
      $region12: #{global_attention_dot.1} parent=5 // pred_fallthru
        _
      %p188 = scmp.lt.s32.totalorder %s21, 2
      // Predicated region
      $region21: #{global_attention_dot.1} parent=5 // pred_check
        %p189 = pneg %p188
      $region22: #{global_attention_dot.1} parent=5 // pred_check_branch
        %191 = sbr.rel (%p189) target = $region24
      $region23: #{global_attention_dot.1} parent=5 // pred_region
        // Predicated region
        $region25: #{global_attention_dot.1} parent=23 // pred_check
          %p192 = pneg %p41
        $region26: #{global_attention_dot.1} parent=23 // pred_check_branch
          %194 = sbr.rel (%p192) target = $region28
        $region27: #{global_attention_dot.1} parent=23 // pred_region
          %s195 = smul.u32 8, %s21
          %p196 = scmp.lt.s32.totalorder %s195, 15
          %s197 = scalar_select %p196, %s195, 15
          %s198 = smul.addr %s197, 8
          %s199 = scalar_lea.vmem %s0, %s198
          %s200 = smul.u32 8, %s21
        $region28: #{global_attention_dot.1} parent=23 // pred_fallthru
          _
        // Predicated region
        $region29: #{global_attention_dot.1} parent=23 // pred_check
          %p201 = pneg %p67
        $region30: #{global_attention_dot.1} parent=23 // pred_check_branch
          %203 = sbr.rel (%p201) target = $region32
        $region31: #{global_attention_dot.1} parent=23 // pred_region
          %s204 = sand.u32 %s57, 1
          %s205 = scalar_lea.sflag [#allocation3], %s204
          %s206 = sand.u32 %s57, 1
          %s207 = smul.addr %s206, 1024
          %s208 = scalar_lea.vmem [#allocation2], %s207
          %s209 = smul.u32 8, %s21
          %s211 = ssub.s32 16384, 16384
          %212 = vsyncadd %s205, %s211
          %s213 = smul.addr %s209, 16
          %s214 = smul.addr %s213, 128
          %s215 = scalar_lea.hbm %s1, %s214
          %s216 = sshll.u32 %s208, 4
          %s217 = int_to_ptr.vmem [resolvable:$true] %s216
          %222 = dma.hbm_to_vmem [thread:$0]  %s215, 16384, %s217, %s205, 128, 128, 8
        $region32: #{global_attention_dot.1} parent=23 // pred_fallthru
          _
      $region24: #{global_attention_dot.1} parent=5 // pred_fallthru
        _
      %p223 = scmp.le.s32.totalorder 1, %s21
      %p224 = scmp.lt.s32.totalorder %s21, 3
      %p225 = pnand %p223, %p224
      %p226 = pneg %p225
      // Predicated region
      $region33: #{global_attention_dot.1} parent=5 // pred_check
        _
      $region34: #{global_attention_dot.1} parent=5 // pred_check_branch
        %228 = sbr.rel (%p225) target = $region36
      $region35: #{global_attention_dot.1} parent=5 // pred_region
        %s229 = ssub.s32 %s21, 1
        %s230 = sand.u32 %s60, 1
        %s231 = scalar_lea.sflag [#allocation3], %s230
        %s232 = sand.u32 %s60, 1
        %s233 = smul.addr %s232, 1024
        %s234 = scalar_lea.vmem [#allocation2], %s233
        // Predicated region
        $region37: #{global_attention_dot.1} parent=35 // pred_check
          %p235 = pneg %p73
        $region38: #{global_attention_dot.1} parent=35 // pred_check_branch
          %237 = sbr.rel (%p235) target = $region40
        $region39: #{global_attention_dot.1} parent=35 // pred_region
          %238 = dma.done %s231, 16384
        $region40: #{global_attention_dot.1} parent=35 // pred_fallthru
          _
        %s239 = smul.u32 8, %s26
        %p240 = scmp.lt.s32.totalorder %s239, 15
        %s241 = scalar_select %p240, %s239, 15
        %s242 = smul.addr %s241, 8
        %s243 = scalar_lea.vmem %s0, %s242
        %p244 = pneg %p47
        %p245 = pneg %p44
        %s246 = sand.u32 %s60, 1
        %s247 = scalar_lea.sflag [#allocation3], %s246
        %s248 = sand.u32 %s60, 1
        %s249 = smul.addr %s248, 1024
        %s250 = scalar_lea.vmem [#allocation2], %s249
        %p251 = pneg %p73
        %p252 = pneg %p70
        %p253 = pneg %p94
        %p254 = pneg %p91
        %p255 = pneg %p115
        %p256 = pneg %p112
        %p257 = pneg %p141
        %p258 = pneg %p138
        %s259 = sand.u32 %s128, 1
        %s260 = scalar_lea.sflag [#allocation4], %s259
        %s261 = sand.u32 %s128, 1
        %s262 = smul.addr %s261, 64
        %s263 = scalar_lea.vmem [#allocation5], %s262
        %p264 = pneg %p167
        %p265 = pneg %p164
        %s266 = sand.u32 %s154, 1
        %s267 = scalar_lea.sflag [#allocation7], %s266
        %s268 = sand.u32 %s154, 1
        %s269 = smul.addr %s268, 64
        %s270 = scalar_lea.vmem [#allocation6], %s269
        %s271 = smul.u32 8, %s26
        %p272 = scmp.lt.s32.totalorder %s271, 15
        %s273 = scalar_select %p272, %s271, 15
        %s274 = smul.addr %s273, 8
        %s275 = scalar_lea.vmem %s0, %s274
        %s276 = smul.u32 8, %s26
        %s277 = smul.u32 8, %s26
        %v278 = vld [vmem:[%s275] sm:$0xff]
        %v279 = vld [vmem:[%s275 + $0x8] sm:$0xff]
        %v280 = vld [vmem:[%s275 + $0x10] sm:$0xff]
        %v281 = vld [vmem:[%s275 + $0x18] sm:$0xff]
        %v282 = vld [vmem:[%s275 + $0x20] sm:$0xff]
        %v283 = vld [vmem:[%s275 + $0x28] sm:$0xff]
        %v284 = vld [vmem:[%s275 + $0x30] sm:$0xff]
        %v285 = vld [vmem:[%s275 + $0x38] sm:$0xff]
        %v286 = vld [vmem:[%s234] sm:$0xff]
        %v287 = vld [vmem:[%s234 + $0x8] sm:$0xff]
        %v288 = vld [vmem:[%s234 + $0x10] sm:$0xff]
        %v289 = vld [vmem:[%s234 + $0x18] sm:$0xff]
        %v290 = vld [vmem:[%s234 + $0x20] sm:$0xff]
        %v291 = vld [vmem:[%s234 + $0x28] sm:$0xff]
        %v292 = vld [vmem:[%s234 + $0x30] sm:$0xff]
        %v293 = vld [vmem:[%s234 + $0x38] sm:$0xff]
        %v294 = vld [vmem:[%s234 + $0x40] sm:$0xff]
        %v295 = vld [vmem:[%s234 + $0x48] sm:$0xff]
        %v296 = vld [vmem:[%s234 + $0x50] sm:$0xff]
        %v297 = vld [vmem:[%s234 + $0x58] sm:$0xff]
        %v298 = vld [vmem:[%s234 + $0x60] sm:$0xff]
        %v299 = vld [vmem:[%s234 + $0x68] sm:$0xff]
        %v300 = vld [vmem:[%s234 + $0x70] sm:$0xff]
        %v301 = vld [vmem:[%s234 + $0x78] sm:$0xff]
        %v302 = vld [vmem:[%s234 + $0x80] sm:$0xff]
        %v303 = vld [vmem:[%s234 + $0x88] sm:$0xff]
        %v304 = vld [vmem:[%s234 + $0x90] sm:$0xff]
        %v305 = vld [vmem:[%s234 + $0x98] sm:$0xff]
        %v306 = vld [vmem:[%s234 + $0xa0] sm:$0xff]
        %v307 = vld [vmem:[%s234 + $0xa8] sm:$0xff]
        %v308 = vld [vmem:[%s234 + $0xb0] sm:$0xff]
        %v309 = vld [vmem:[%s234 + $0xb8] sm:$0xff]
        %v310 = vld [vmem:[%s234 + $0xc0] sm:$0xff]
        %v311 = vld [vmem:[%s234 + $0xc8] sm:$0xff]
        %v312 = vld [vmem:[%s234 + $0xd0] sm:$0xff]
        %v313 = vld [vmem:[%s234 + $0xd8] sm:$0xff]
        %v314 = vld [vmem:[%s234 + $0xe0] sm:$0xff]
        %v315 = vld [vmem:[%s234 + $0xe8] sm:$0xff]
        %v316 = vld [vmem:[%s234 + $0xf0] sm:$0xff]
        %v317 = vld [vmem:[%s234 + $0xf8] sm:$0xff]
        %v318 = vld [vmem:[%s234 + $0x100] sm:$0xff]
        %v319 = vld [vmem:[%s234 + $0x108] sm:$0xff]
        %v320 = vld [vmem:[%s234 + $0x110] sm:$0xff]
        %v321 = vld [vmem:[%s234 + $0x118] sm:$0xff]
        %v322 = vld [vmem:[%s234 + $0x120] sm:$0xff]
        %v323 = vld [vmem:[%s234 + $0x128] sm:$0xff]
        %v324 = vld [vmem:[%s234 + $0x130] sm:$0xff]
        %v325 = vld [vmem:[%s234 + $0x138] sm:$0xff]
        %v326 = vld [vmem:[%s234 + $0x140] sm:$0xff]
        %v327 = vld [vmem:[%s234 + $0x148] sm:$0xff]
        %v328 = vld [vmem:[%s234 + $0x150] sm:$0xff]
        %v329 = vld [vmem:[%s234 + $0x158] sm:$0xff]
        %v330 = vld [vmem:[%s234 + $0x160] sm:$0xff]
        %v331 = vld [vmem:[%s234 + $0x168] sm:$0xff]
        %v332 = vld [vmem:[%s234 + $0x170] sm:$0xff]
        %v333 = vld [vmem:[%s234 + $0x178] sm:$0xff]
        %v334 = vld [vmem:[%s234 + $0x180] sm:$0xff]
        %v335 = vld [vmem:[%s234 + $0x188] sm:$0xff]
        %v336 = vld [vmem:[%s234 + $0x190] sm:$0xff]
        %v337 = vld [vmem:[%s234 + $0x198] sm:$0xff]
        %v338 = vld [vmem:[%s234 + $0x1a0] sm:$0xff]
        %v339 = vld [vmem:[%s234 + $0x1a8] sm:$0xff]
        %v340 = vld [vmem:[%s234 + $0x1b0] sm:$0xff]
        %v341 = vld [vmem:[%s234 + $0x1b8] sm:$0xff]
        %v342 = vld [vmem:[%s234 + $0x1c0] sm:$0xff]
        %v343 = vld [vmem:[%s234 + $0x1c8] sm:$0xff]
        %v344 = vld [vmem:[%s234 + $0x1d0] sm:$0xff]
        %v345 = vld [vmem:[%s234 + $0x1d8] sm:$0xff]
        %v346 = vld [vmem:[%s234 + $0x1e0] sm:$0xff]
        %v347 = vld [vmem:[%s234 + $0x1e8] sm:$0xff]
        %v348 = vld [vmem:[%s234 + $0x1f0] sm:$0xff]
        %v349 = vld [vmem:[%s234 + $0x1f8] sm:$0xff]
        %v350 = vld [vmem:[%s234 + $0x200] sm:$0xff]
        %v351 = vld [vmem:[%s234 + $0x208] sm:$0xff]
        %v352 = vld [vmem:[%s234 + $0x210] sm:$0xff]
        %v353 = vld [vmem:[%s234 + $0x218] sm:$0xff]
        %v354 = vld [vmem:[%s234 + $0x220] sm:$0xff]
        %v355 = vld [vmem:[%s234 + $0x228] sm:$0xff]
        %v356 = vld [vmem:[%s234 + $0x230] sm:$0xff]
        %v357 = vld [vmem:[%s234 + $0x238] sm:$0xff]
        %v358 = vld [vmem:[%s234 + $0x240] sm:$0xff]
        %v359 = vld [vmem:[%s234 + $0x248] sm:$0xff]
        %v360 = vld [vmem:[%s234 + $0x250] sm:$0xff]
        %v361 = vld [vmem:[%s234 + $0x258] sm:$0xff]
        %v362 = vld [vmem:[%s234 + $0x260] sm:$0xff]
        %v363 = vld [vmem:[%s234 + $0x268] sm:$0xff]
        %v364 = vld [vmem:[%s234 + $0x270] sm:$0xff]
        %v365 = vld [vmem:[%s234 + $0x278] sm:$0xff]
        %v366 = vld [vmem:[%s234 + $0x280] sm:$0xff]
        %v367 = vld [vmem:[%s234 + $0x288] sm:$0xff]
        %v368 = vld [vmem:[%s234 + $0x290] sm:$0xff]
        %v369 = vld [vmem:[%s234 + $0x298] sm:$0xff]
        %v370 = vld [vmem:[%s234 + $0x2a0] sm:$0xff]
        %v371 = vld [vmem:[%s234 + $0x2a8] sm:$0xff]
        %v372 = vld [vmem:[%s234 + $0x2b0] sm:$0xff]
        %v373 = vld [vmem:[%s234 + $0x2b8] sm:$0xff]
        %v374 = vld [vmem:[%s234 + $0x2c0] sm:$0xff]
        %v375 = vld [vmem:[%s234 + $0x2c8] sm:$0xff]
        %v376 = vld [vmem:[%s234 + $0x2d0] sm:$0xff]
        %v377 = vld [vmem:[%s234 + $0x2d8] sm:$0xff]
        %v378 = vld [vmem:[%s234 + $0x2e0] sm:$0xff]
        %v379 = vld [vmem:[%s234 + $0x2e8] sm:$0xff]
        %v380 = vld [vmem:[%s234 + $0x2f0] sm:$0xff]
        %v381 = vld [vmem:[%s234 + $0x2f8] sm:$0xff]
        %v382 = vld [vmem:[%s234 + $0x300] sm:$0xff]
        %v383 = vld [vmem:[%s234 + $0x308] sm:$0xff]
        %v384 = vld [vmem:[%s234 + $0x310] sm:$0xff]
        %v385 = vld [vmem:[%s234 + $0x318] sm:$0xff]
        %v386 = vld [vmem:[%s234 + $0x320] sm:$0xff]
        %v387 = vld [vmem:[%s234 + $0x328] sm:$0xff]
        %v388 = vld [vmem:[%s234 + $0x330] sm:$0xff]
        %v389 = vld [vmem:[%s234 + $0x338] sm:$0xff]
        %v390 = vld [vmem:[%s234 + $0x340] sm:$0xff]
        %v391 = vld [vmem:[%s234 + $0x348] sm:$0xff]
        %v392 = vld [vmem:[%s234 + $0x350] sm:$0xff]
        %v393 = vld [vmem:[%s234 + $0x358] sm:$0xff]
        %v394 = vld [vmem:[%s234 + $0x360] sm:$0xff]
        %v395 = vld [vmem:[%s234 + $0x368] sm:$0xff]
        %v396 = vld [vmem:[%s234 + $0x370] sm:$0xff]
        %v397 = vld [vmem:[%s234 + $0x378] sm:$0xff]
        %v398 = vld [vmem:[%s234 + $0x380] sm:$0xff]
        %v399 = vld [vmem:[%s234 + $0x388] sm:$0xff]
        %v400 = vld [vmem:[%s234 + $0x390] sm:$0xff]
        %v401 = vld [vmem:[%s234 + $0x398] sm:$0xff]
        %v402 = vld [vmem:[%s234 + $0x3a0] sm:$0xff]
        %v403 = vld [vmem:[%s234 + $0x3a8] sm:$0xff]
        %v404 = vld [vmem:[%s234 + $0x3b0] sm:$0xff]
        %v405 = vld [vmem:[%s234 + $0x3b8] sm:$0xff]
        %v406 = vld [vmem:[%s234 + $0x3c0] sm:$0xff]
        %v407 = vld [vmem:[%s234 + $0x3c8] sm:$0xff]
        %v408 = vld [vmem:[%s234 + $0x3d0] sm:$0xff]
        %v409 = vld [vmem:[%s234 + $0x3d8] sm:$0xff]
        %v410 = vld [vmem:[%s234 + $0x3e0] sm:$0xff]
        %v411 = vld [vmem:[%s234 + $0x3e8] sm:$0xff]
        %v412 = vld [vmem:[%s234 + $0x3f0] sm:$0xff]
        %v413 = vld [vmem:[%s234 + $0x3f8] sm:$0xff]
        %414 = vmatprep.subr.mxu0 0.0
        %415 = vmatpush1.xpose.msra.mxu0 %v286
        %416 = vmatprep.subr.mxu0 0.0
        %417 = vmatpush1.xpose.msra.mxu0 %v287
        %418 = vmatprep.subr.mxu0 0.0
        %419 = vmatpush1.xpose.msra.mxu0 %v288
        %420 = vmatprep.subr.mxu0 0.0
        %421 = vmatpush1.xpose.msra.mxu0 %v289
        %422 = vmatprep.subr.mxu0 0.0
        %423 = vmatpush1.xpose.msra.mxu0 %v290
        %424 = vmatprep.subr.mxu0 0.0
        %425 = vmatpush1.xpose.msra.mxu0 %v291
        %426 = vmatprep.subr.mxu0 0.0
        %427 = vmatpush1.xpose.msra.mxu0 %v292
        %428 = vmatprep.subr.mxu0 0.0
        %429 = vmatpush1.xpose.msra.mxu0 %v293
        %430 = vmatprep.subr.mxu0 0.0
        %431 = vmatpush1.xpose.msra.mxu0 %v294
        %432 = vmatprep.subr.mxu0 0.0
        %433 = vmatpush1.xpose.msra.mxu0 %v295
        %434 = vmatprep.subr.mxu0 0.0
        %435 = vmatpush1.xpose.msra.mxu0 %v296
        %436 = vmatprep.subr.mxu0 0.0
        %437 = vmatpush1.xpose.msra.mxu0 %v297
        %438 = vmatprep.subr.mxu0 0.0
        %439 = vmatpush1.xpose.msra.mxu0 %v298
        %440 = vmatprep.subr.mxu0 0.0
        %441 = vmatpush1.xpose.msra.mxu0 %v299
        %442 = vmatprep.subr.mxu0 0.0
        %443 = vmatpush1.xpose.msra.mxu0 %v300
        %444 = vmatprep.subr.mxu0 0.0
        %445 = vmatpush1.xpose.msra.mxu0 %v301
        %446 = vmatprep.subr.mxu0 0.0
        %447 = vmatpush1.xpose.msra.mxu0 0.0
        %448 = vmatprep.subr.mxu0 0.0
        %449 = vmatpush1.xpose.msra.mxu0 0.0
        %450 = vmatprep.subr.mxu0 0.0
        %451 = vmatpush1.xpose.msra.mxu0 0.0
        %452 = vmatprep.subr.mxu0 0.0
        %453 = vmatpush1.xpose.msra.mxu0 0.0
        %454 = vmatprep.subr.mxu0 0.0
        %455 = vmatpush1.xpose.msra.mxu0 0.0
        %456 = vmatprep.subr.mxu0 0.0
        %457 = vmatpush1.xpose.msra.mxu0 0.0
        %458 = vmatprep.subr.mxu0 0.0
        %459 = vmatpush1.xpose.msra.mxu0 0.0
        %460 = vmatprep.subr.mxu0 0.0
        %461 = vmatpush1.xpose.msra.mxu0 0.0
        %462 = vmatprep.subr.mxu0 0.0
        %463 = vmatpush1.xpose.msra.mxu0 0.0
        %464 = vmatprep.subr.mxu0 0.0
        %465 = vmatpush1.xpose.msra.mxu0 0.0
        %466 = vmatprep.subr.mxu0 0.0
        %467 = vmatpush1.xpose.msra.mxu0 0.0
        %468 = vmatprep.subr.mxu0 0.0
        %469 = vmatpush1.xpose.msra.mxu0 0.0
        %470 = vmatprep.subr.mxu0 0.0
        %471 = vmatpush1.xpose.msra.mxu0 0.0
        %472 = vmatprep.subr.mxu0 0.0
        %473 = vmatpush1.xpose.msra.mxu0 0.0
        %474 = vmatprep.subr.mxu0 0.0
        %475 = vmatpush1.xpose.msra.mxu0 0.0
        %476 = vmatprep.subr.mxu0 0.0
        %477 = vmatpush1.xpose.msra.mxu0 0.0
        %478 = vmatprep.mubr.f32.mxu0 0.0
        %479 = vmatmul.mubr.f32.gmra.mrb[0].mxu0 %v278
        %v480 = vpop.f32.mrb[0].mxu0
        %v481 = vadd.f32 0.0, %v480
        %v482 = vpop.f32.mrb[0].mxu0
        %483 = vdwg.mxu0
        %484 = vmatprep.subr.mxu0 0.0
        %485 = vmatpush1.xpose.msra.mxu0 %v302
        %486 = vmatprep.subr.mxu0 0.0
        %487 = vmatpush1.xpose.msra.mxu0 %v303
        %488 = vmatprep.subr.mxu0 0.0
        %489 = vmatpush1.xpose.msra.mxu0 %v304
        %490 = vmatprep.subr.mxu0 0.0
        %491 = vmatpush1.xpose.msra.mxu0 %v305
        %492 = vmatprep.subr.mxu0 0.0
        %493 = vmatpush1.xpose.msra.mxu0 %v306
        %494 = vmatprep.subr.mxu0 0.0
        %495 = vmatpush1.xpose.msra.mxu0 %v307
        %496 = vmatprep.subr.mxu0 0.0
        %497 = vmatpush1.xpose.msra.mxu0 %v308
        %498 = vmatprep.subr.mxu0 0.0
        %499 = vmatpush1.xpose.msra.mxu0 %v309
        %500 = vmatprep.subr.mxu0 0.0
        %501 = vmatpush1.xpose.msra.mxu0 %v310
        %502 = vmatprep.subr.mxu0 0.0
        %503 = vmatpush1.xpose.msra.mxu0 %v311
        %504 = vmatprep.subr.mxu0 0.0
        %505 = vmatpush1.xpose.msra.mxu0 %v312
        %506 = vmatprep.subr.mxu0 0.0
        %507 = vmatpush1.xpose.msra.mxu0 %v313
        %508 = vmatprep.subr.mxu0 0.0
        %509 = vmatpush1.xpose.msra.mxu0 %v314
        %510 = vmatprep.subr.mxu0 0.0
        %511 = vmatpush1.xpose.msra.mxu0 %v315
        %512 = vmatprep.subr.mxu0 0.0
        %513 = vmatpush1.xpose.msra.mxu0 %v316
        %514 = vmatprep.subr.mxu0 0.0
        %515 = vmatpush1.xpose.msra.mxu0 %v317
        %516 = vmatprep.subr.mxu0 0.0
        %517 = vmatpush1.xpose.msra.mxu0 0.0
        %518 = vmatprep.subr.mxu0 0.0
        %519 = vmatpush1.xpose.msra.mxu0 0.0
        %520 = vmatprep.subr.mxu0 0.0
        %521 = vmatpush1.xpose.msra.mxu0 0.0
        %522 = vmatprep.subr.mxu0 0.0
        %523 = vmatpush1.xpose.msra.mxu0 0.0
        %524 = vmatprep.subr.mxu0 0.0
        %525 = vmatpush1.xpose.msra.mxu0 0.0
        %526 = vmatprep.subr.mxu0 0.0
        %527 = vmatpush1.xpose.msra.mxu0 0.0
        %528 = vmatprep.subr.mxu0 0.0
        %529 = vmatpush1.xpose.msra.mxu0 0.0
        %530 = vmatprep.subr.mxu0 0.0
        %531 = vmatpush1.xpose.msra.mxu0 0.0
        %532 = vmatprep.subr.mxu0 0.0
        %533 = vmatpush1.xpose.msra.mxu0 0.0
        %534 = vmatprep.subr.mxu0 0.0
        %535 = vmatpush1.xpose.msra.mxu0 0.0
        %536 = vmatprep.subr.mxu0 0.0
        %537 = vmatpush1.xpose.msra.mxu0 0.0
        %538 = vmatprep.subr.mxu0 0.0
        %539 = vmatpush1.xpose.msra.mxu0 0.0
        %540 = vmatprep.subr.mxu0 0.0
        %541 = vmatpush1.xpose.msra.mxu0 0.0
        %542 = vmatprep.subr.mxu0 0.0
        %543 = vmatpush1.xpose.msra.mxu0 0.0
        %544 = vmatprep.subr.mxu0 0.0
        %545 = vmatpush1.xpose.msra.mxu0 0.0
        %546 = vmatprep.subr.mxu0 0.0
        %547 = vmatpush1.xpose.msra.mxu0 0.0
        %548 = vmatprep.mubr.f32.mxu0 0.0
        %549 = vmatmul.mubr.f32.gmra.mrb[0].mxu0 %v279
        %v550 = vpop.f32.mrb[0].mxu0
        %v551 = vadd.f32 0.0, %v550
        %v552 = vpop.f32.mrb[0].mxu0
        %553 = vdwg.mxu0
        %554 = vmatprep.subr.mxu0 0.0
        %555 = vmatpush1.xpose.msra.mxu0 %v318
        %556 = vmatprep.subr.mxu0 0.0
        %557 = vmatpush1.xpose.msra.mxu0 %v319
        %558 = vmatprep.subr.mxu0 0.0
        %559 = vmatpush1.xpose.msra.mxu0 %v320
        %560 = vmatprep.subr.mxu0 0.0
        %561 = vmatpush1.xpose.msra.mxu0 %v321
        %562 = vmatprep.subr.mxu0 0.0
        %563 = vmatpush1.xpose.msra.mxu0 %v322
        %564 = vmatprep.subr.mxu0 0.0
        %565 = vmatpush1.xpose.msra.mxu0 %v323
        %566 = vmatprep.subr.mxu0 0.0
        %567 = vmatpush1.xpose.msra.mxu0 %v324
        %568 = vmatprep.subr.mxu0 0.0
        %569 = vmatpush1.xpose.msra.mxu0 %v325
        %570 = vmatprep.subr.mxu0 0.0
        %571 = vmatpush1.xpose.msra.mxu0 %v326
        %572 = vmatprep.subr.mxu0 0.0
        %573 = vmatpush1.xpose.msra.mxu0 %v327
        %574 = vmatprep.subr.mxu0 0.0
        %575 = vmatpush1.xpose.msra.mxu0 %v328
        %576 = vmatprep.subr.mxu0 0.0
        %577 = vmatpush1.xpose.msra.mxu0 %v329
        %578 = vmatprep.subr.mxu0 0.0
        %579 = vmatpush1.xpose.msra.mxu0 %v330
        %580 = vmatprep.subr.mxu0 0.0
        %581 = vmatpush1.xpose.msra.mxu0 %v331
        %582 = vmatprep.subr.mxu0 0.0
        %583 = vmatpush1.xpose.msra.mxu0 %v332
        %584 = vmatprep.subr.mxu0 0.0
        %585 = vmatpush1.xpose.msra.mxu0 %v333
        %586 = vmatprep.subr.mxu0 0.0
        %587 = vmatpush1.xpose.msra.mxu0 0.0
        %588 = vmatprep.subr.mxu0 0.0
        %589 = vmatpush1.xpose.msra.mxu0 0.0
        %590 = vmatprep.subr.mxu0 0.0
        %591 = vmatpush1.xpose.msra.mxu0 0.0
        %592 = vmatprep.subr.mxu0 0.0
        %593 = vmatpush1.xpose.msra.mxu0 0.0
        %594 = vmatprep.subr.mxu0 0.0
        %595 = vmatpush1.xpose.msra.mxu0 0.0
        %596 = vmatprep.subr.mxu0 0.0
        %597 = vmatpush1.xpose.msra.mxu0 0.0
        %598 = vmatprep.subr.mxu0 0.0
        %599 = vmatpush1.xpose.msra.mxu0 0.0
        %600 = vmatprep.subr.mxu0 0.0
        %601 = vmatpush1.xpose.msra.mxu0 0.0
        %602 = vmatprep.subr.mxu0 0.0
        %603 = vmatpush1.xpose.msra.mxu0 0.0
        %604 = vmatprep.subr.mxu0 0.0
        %605 = vmatpush1.xpose.msra.mxu0 0.0
        %606 = vmatprep.subr.mxu0 0.0
        %607 = vmatpush1.xpose.msra.mxu0 0.0
        %608 = vmatprep.subr.mxu0 0.0
        %609 = vmatpush1.xpose.msra.mxu0 0.0
        %610 = vmatprep.subr.mxu0 0.0
        %611 = vmatpush1.xpose.msra.mxu0 0.0
        %612 = vmatprep.subr.mxu0 0.0
        %613 = vmatpush1.xpose.msra.mxu0 0.0
        %614 = vmatprep.subr.mxu0 0.0
        %615 = vmatpush1.xpose.msra.mxu0 0.0
        %616 = vmatprep.subr.mxu0 0.0
        %617 = vmatpush1.xpose.msra.mxu0 0.0
        %618 = vmatprep.mubr.f32.mxu0 0.0
        %619 = vmatmul.mubr.f32.gmra.mrb[0].mxu0 %v280
        %v620 = vpop.f32.mrb[0].mxu0
        %v621 = vadd.f32 0.0, %v620
        %v622 = vpop.f32.mrb[0].mxu0
        %623 = vdwg.mxu0
        %624 = vmatprep.subr.mxu0 0.0
        %625 = vmatpush1.xpose.msra.mxu0 %v334
        %626 = vmatprep.subr.mxu0 0.0
        %627 = vmatpush1.xpose.msra.mxu0 %v335
        %628 = vmatprep.subr.mxu0 0.0
        %629 = vmatpush1.xpose.msra.mxu0 %v336
        %630 = vmatprep.subr.mxu0 0.0
        %631 = vmatpush1.xpose.msra.mxu0 %v337
        %632 = vmatprep.subr.mxu0 0.0
        %633 = vmatpush1.xpose.msra.mxu0 %v338
        %634 = vmatprep.subr.mxu0 0.0
        %635 = vmatpush1.xpose.msra.mxu0 %v339
        %636 = vmatprep.subr.mxu0 0.0
        %637 = vmatpush1.xpose.msra.mxu0 %v340
        %638 = vmatprep.subr.mxu0 0.0
        %639 = vmatpush1.xpose.msra.mxu0 %v341
        %640 = vmatprep.subr.mxu0 0.0
        %641 = vmatpush1.xpose.msra.mxu0 %v342
        %642 = vmatprep.subr.mxu0 0.0
        %643 = vmatpush1.xpose.msra.mxu0 %v343
        %644 = vmatprep.subr.mxu0 0.0
        %645 = vmatpush1.xpose.msra.mxu0 %v344
        %646 = vmatprep.subr.mxu0 0.0
        %647 = vmatpush1.xpose.msra.mxu0 %v345
        %648 = vmatprep.subr.mxu0 0.0
        %649 = vmatpush1.xpose.msra.mxu0 %v346
        %650 = vmatprep.subr.mxu0 0.0
        %651 = vmatpush1.xpose.msra.mxu0 %v347
        %652 = vmatprep.subr.mxu0 0.0
        %653 = vmatpush1.xpose.msra.mxu0 %v348
        %654 = vmatprep.subr.mxu0 0.0
        %655 = vmatpush1.xpose.msra.mxu0 %v349
        %656 = vmatprep.subr.mxu0 0.0
        %657 = vmatpush1.xpose.msra.mxu0 0.0
        %658 = vmatprep.subr.mxu0 0.0
        %659 = vmatpush1.xpose.msra.mxu0 0.0
        %660 = vmatprep.subr.mxu0 0.0
        %661 = vmatpush1.xpose.msra.mxu0 0.0
        %662 = vmatprep.subr.mxu0 0.0
        %663 = vmatpush1.xpose.msra.mxu0 0.0
        %664 = vmatprep.subr.mxu0 0.0
        %665 = vmatpush1.xpose.msra.mxu0 0.0
        %666 = vmatprep.subr.mxu0 0.0
        %667 = vmatpush1.xpose.msra.mxu0 0.0
        %668 = vmatprep.subr.mxu0 0.0
        %669 = vmatpush1.xpose.msra.mxu0 0.0
        %670 = vmatprep.subr.mxu0 0.0
        %671 = vmatpush1.xpose.msra.mxu0 0.0
        %672 = vmatprep.subr.mxu0 0.0
        %673 = vmatpush1.xpose.msra.mxu0 0.0
        %674 = vmatprep.subr.mxu0 0.0
        %675 = vmatpush1.xpose.msra.mxu0 0.0
        %676 = vmatprep.subr.mxu0 0.0
        %677 = vmatpush1.xpose.msra.mxu0 0.0
        %678 = vmatprep.subr.mxu0 0.0
        %679 = vmatpush1.xpose.msra.mxu0 0.0
        %680 = vmatprep.subr.mxu0 0.0
        %681 = vmatpush1.xpose.msra.mxu0 0.0
        %682 = vmatprep.subr.mxu0 0.0
        %683 = vmatpush1.xpose.msra.mxu0 0.0
        %684 = vmatprep.subr.mxu0 0.0
        %685 = vmatpush1.xpose.msra.mxu0 0.0
        %686 = vmatprep.subr.mxu0 0.0
        %687 = vmatpush1.xpose.msra.mxu0 0.0
        %688 = vmatprep.mubr.f32.mxu0 0.0
        %689 = vmatmul.mubr.f32.gmra.mrb[0].mxu0 %v281
        %v690 = vpop.f32.mrb[0].mxu0
        %v691 = vadd.f32 0.0, %v690
        %v692 = vpop.f32.mrb[0].mxu0
        %693 = vdwg.mxu0
        %694 = vmatprep.subr.mxu0 0.0
        %695 = vmatpush1.xpose.msra.mxu0 %v350
        %696 = vmatprep.subr.mxu0 0.0
        %697 = vmatpush1.xpose.msra.mxu0 %v351
        %698 = vmatprep.subr.mxu0 0.0
        %699 = vmatpush1.xpose.msra.mxu0 %v352
        %700 = vmatprep.subr.mxu0 0.0
        %701 = vmatpush1.xpose.msra.mxu0 %v353
        %702 = vmatprep.subr.mxu0 0.0
        %703 = vmatpush1.xpose.msra.mxu0 %v354
        %704 = vmatprep.subr.mxu0 0.0
        %705 = vmatpush1.xpose.msra.mxu0 %v355
        %706 = vmatprep.subr.mxu0 0.0
        %707 = vmatpush1.xpose.msra.mxu0 %v356
        %708 = vmatprep.subr.mxu0 0.0
        %709 = vmatpush1.xpose.msra.mxu0 %v357
        %710 = vmatprep.subr.mxu0 0.0
        %711 = vmatpush1.xpose.msra.mxu0 %v358
        %712 = vmatprep.subr.mxu0 0.0
        %713 = vmatpush1.xpose.msra.mxu0 %v359
        %714 = vmatprep.subr.mxu0 0.0
        %715 = vmatpush1.xpose.msra.mxu0 %v360
        %716 = vmatprep.subr.mxu0 0.0
        %717 = vmatpush1.xpose.msra.mxu0 %v361
        %718 = vmatprep.subr.mxu0 0.0
        %719 = vmatpush1.xpose.msra.mxu0 %v362
        %720 = vmatprep.subr.mxu0 0.0
        %721 = vmatpush1.xpose.msra.mxu0 %v363
        %722 = vmatprep.subr.mxu0 0.0
        %723 = vmatpush1.xpose.msra.mxu0 %v364
        %724 = vmatprep.subr.mxu0 0.0
        %725 = vmatpush1.xpose.msra.mxu0 %v365
        %726 = vmatprep.subr.mxu0 0.0
        %727 = vmatpush1.xpose.msra.mxu0 0.0
        %728 = vmatprep.subr.mxu0 0.0
        %729 = vmatpush1.xpose.msra.mxu0 0.0
        %730 = vmatprep.subr.mxu0 0.0
        %731 = vmatpush1.xpose.msra.mxu0 0.0
        %732 = vmatprep.subr.mxu0 0.0
        %733 = vmatpush1.xpose.msra.mxu0 0.0
        %734 = vmatprep.subr.mxu0 0.0
        %735 = vmatpush1.xpose.msra.mxu0 0.0
        %736 = vmatprep.subr.mxu0 0.0
        %737 = vmatpush1.xpose.msra.mxu0 0.0
        %738 = vmatprep.subr.mxu0 0.0
        %739 = vmatpush1.xpose.msra.mxu0 0.0
        %740 = vmatprep.subr.mxu0 0.0
        %741 = vmatpush1.xpose.msra.mxu0 0.0
        %742 = vmatprep.subr.mxu0 0.0
        %743 = vmatpush1.xpose.msra.mxu0 0.0
        %744 = vmatprep.subr.mxu0 0.0
        %745 = vmatpush1.xpose.msra.mxu0 0.0
        %746 = vmatprep.subr.mxu0 0.0
        %747 = vmatpush1.xpose.msra.mxu0 0.0
        %748 = vmatprep.subr.mxu0 0.0
        %749 = vmatpush1.xpose.msra.mxu0 0.0
        %750 = vmatprep.subr.mxu0 0.0
        %751 = vmatpush1.xpose.msra.mxu0 0.0
        %752 = vmatprep.subr.mxu0 0.0
        %753 = vmatpush1.xpose.msra.mxu0 0.0
        %754 = vmatprep.subr.mxu0 0.0
        %755 = vmatpush1.xpose.msra.mxu0 0.0
        %756 = vmatprep.subr.mxu0 0.0
        %757 = vmatpush1.xpose.msra.mxu0 0.0
        %758 = vmatprep.mubr.f32.mxu0 0.0
        %759 = vmatmul.mubr.f32.gmra.mrb[0].mxu0 %v282
        %v760 = vpop.f32.mrb[0].mxu0
        %v761 = vadd.f32 0.0, %v760
        %v762 = vpop.f32.mrb[0].mxu0
        %763 = vdwg.mxu0
        %764 = vmatprep.subr.mxu0 0.0
        %765 = vmatpush1.xpose.msra.mxu0 %v366
        %766 = vmatprep.subr.mxu0 0.0
        %767 = vmatpush1.xpose.msra.mxu0 %v367
        %768 = vmatprep.subr.mxu0 0.0
        %769 = vmatpush1.xpose.msra.mxu0 %v368
        %770 = vmatprep.subr.mxu0 0.0
        %771 = vmatpush1.xpose.msra.mxu0 %v369
        %772 = vmatprep.subr.mxu0 0.0
        %773 = vmatpush1.xpose.msra.mxu0 %v370
        %774 = vmatprep.subr.mxu0 0.0
        %775 = vmatpush1.xpose.msra.mxu0 %v371
        %776 = vmatprep.subr.mxu0 0.0
        %777 = vmatpush1.xpose.msra.mxu0 %v372
        %778 = vmatprep.subr.mxu0 0.0
        %779 = vmatpush1.xpose.msra.mxu0 %v373
        %780 = vmatprep.subr.mxu0 0.0
        %781 = vmatpush1.xpose.msra.mxu0 %v374
        %782 = vmatprep.subr.mxu0 0.0
        %783 = vmatpush1.xpose.msra.mxu0 %v375
        %784 = vmatprep.subr.mxu0 0.0
        %785 = vmatpush1.xpose.msra.mxu0 %v376
        %786 = vmatprep.subr.mxu0 0.0
        %787 = vmatpush1.xpose.msra.mxu0 %v377
        %788 = vmatprep.subr.mxu0 0.0
        %789 = vmatpush1.xpose.msra.mxu0 %v378
        %790 = vmatprep.subr.mxu0 0.0
        %791 = vmatpush1.xpose.msra.mxu0 %v379
        %792 = vmatprep.subr.mxu0 0.0
        %793 = vmatpush1.xpose.msra.mxu0 %v380
        %794 = vmatprep.subr.mxu0 0.0
        %795 = vmatpush1.xpose.msra.mxu0 %v381
        %796 = vmatprep.subr.mxu0 0.0
        %797 = vmatpush1.xpose.msra.mxu0 0.0
        %798 = vmatprep.subr.mxu0 0.0
        %799 = vmatpush1.xpose.msra.mxu0 0.0
        %800 = vmatprep.subr.mxu0 0.0
        %801 = vmatpush1.xpose.msra.mxu0 0.0
        %802 = vmatprep.subr.mxu0 0.0
        %803 = vmatpush1.xpose.msra.mxu0 0.0
        %804 = vmatprep.subr.mxu0 0.0
        %805 = vmatpush1.xpose.msra.mxu0 0.0
        %806 = vmatprep.subr.mxu0 0.0
        %807 = vmatpush1.xpose.msra.mxu0 0.0
        %808 = vmatprep.subr.mxu0 0.0
        %809 = vmatpush1.xpose.msra.mxu0 0.0
        %810 = vmatprep.subr.mxu0 0.0
        %811 = vmatpush1.xpose.msra.mxu0 0.0
        %812 = vmatprep.subr.mxu0 0.0
        %813 = vmatpush1.xpose.msra.mxu0 0.0
        %814 = vmatprep.subr.mxu0 0.0
        %815 = vmatpush1.xpose.msra.mxu0 0.0
        %816 = vmatprep.subr.mxu0 0.0
        %817 = vmatpush1.xpose.msra.mxu0 0.0
        %818 = vmatprep.subr.mxu0 0.0
        %819 = vmatpush1.xpose.msra.mxu0 0.0
        %820 = vmatprep.subr.mxu0 0.0
        %821 = vmatpush1.xpose.msra.mxu0 0.0
        %822 = vmatprep.subr.mxu0 0.0
        %823 = vmatpush1.xpose.msra.mxu0 0.0
        %824 = vmatprep.subr.mxu0 0.0
        %825 = vmatpush1.xpose.msra.mxu0 0.0
        %826 = vmatprep.subr.mxu0 0.0
        %827 = vmatpush1.xpose.msra.mxu0 0.0
        %828 = vmatprep.mubr.f32.mxu0 0.0
        %829 = vmatmul.mubr.f32.gmra.mrb[0].mxu0 %v283
        %v830 = vpop.f32.mrb[0].mxu0
        %v831 = vadd.f32 0.0, %v830
        %v832 = vpop.f32.mrb[0].mxu0
        %833 = vdwg.mxu0
        %834 = vmatprep.subr.mxu0 0.0
        %835 = vmatpush1.xpose.msra.mxu0 %v382
        %836 = vmatprep.subr.mxu0 0.0
        %837 = vmatpush1.xpose.msra.mxu0 %v383
        %838 = vmatprep.subr.mxu0 0.0
        %839 = vmatpush1.xpose.msra.mxu0 %v384
        %840 = vmatprep.subr.mxu0 0.0
        %841 = vmatpush1.xpose.msra.mxu0 %v385
        %842 = vmatprep.subr.mxu0 0.0
        %843 = vmatpush1.xpose.msra.mxu0 %v386
        %844 = vmatprep.subr.mxu0 0.0
        %845 = vmatpush1.xpose.msra.mxu0 %v387
        %846 = vmatprep.subr.mxu0 0.0
        %847 = vmatpush1.xpose.msra.mxu0 %v388
        %848 = vmatprep.subr.mxu0 0.0
        %849 = vmatpush1.xpose.msra.mxu0 %v389
        %850 = vmatprep.subr.mxu0 0.0
        %851 = vmatpush1.xpose.msra.mxu0 %v390
        %852 = vmatprep.subr.mxu0 0.0
        %853 = vmatpush1.xpose.msra.mxu0 %v391
        %854 = vmatprep.subr.mxu0 0.0
        %855 = vmatpush1.xpose.msra.mxu0 %v392
        %856 = vmatprep.subr.mxu0 0.0
        %857 = vmatpush1.xpose.msra.mxu0 %v393
        %858 = vmatprep.subr.mxu0 0.0
        %859 = vmatpush1.xpose.msra.mxu0 %v394
        %860 = vmatprep.subr.mxu0 0.0
        %861 = vmatpush1.xpose.msra.mxu0 %v395
        %862 = vmatprep.subr.mxu0 0.0
        %863 = vmatpush1.xpose.msra.mxu0 %v396
        %864 = vmatprep.subr.mxu0 0.0
        %865 = vmatpush1.xpose.msra.mxu0 %v397
        %866 = vmatprep.subr.mxu0 0.0
        %867 = vmatpush1.xpose.msra.mxu0 0.0
        %868 = vmatprep.subr.mxu0 0.0
        %869 = vmatpush1.xpose.msra.mxu0 0.0
        %870 = vmatprep.subr.mxu0 0.0
        %871 = vmatpush1.xpose.msra.mxu0 0.0
        %872 = vmatprep.subr.mxu0 0.0
        %873 = vmatpush1.xpose.msra.mxu0 0.0
        %874 = vmatprep.subr.mxu0 0.0
        %875 = vmatpush1.xpose.msra.mxu0 0.0
        %876 = vmatprep.subr.mxu0 0.0
        %877 = vmatpush1.xpose.msra.mxu0 0.0
        %878 = vmatprep.subr.mxu0 0.0
        %879 = vmatpush1.xpose.msra.mxu0 0.0
        %880 = vmatprep.subr.mxu0 0.0
        %881 = vmatpush1.xpose.msra.mxu0 0.0
        %882 = vmatprep.subr.mxu0 0.0
        %883 = vmatpush1.xpose.msra.mxu0 0.0
        %884 = vmatprep.subr.mxu0 0.0
        %885 = vmatpush1.xpose.msra.mxu0 0.0
        %886 = vmatprep.subr.mxu0 0.0
        %887 = vmatpush1.xpose.msra.mxu0 0.0
        %888 = vmatprep.subr.mxu0 0.0
        %889 = vmatpush1.xpose.msra.mxu0 0.0
        %890 = vmatprep.subr.mxu0 0.0
        %891 = vmatpush1.xpose.msra.mxu0 0.0
        %892 = vmatprep.subr.mxu0 0.0
        %893 = vmatpush1.xpose.msra.mxu0 0.0
        %894 = vmatprep.subr.mxu0 0.0
        %895 = vmatpush1.xpose.msra.mxu0 0.0
        %896 = vmatprep.subr.mxu0 0.0
        %897 = vmatpush1.xpose.msra.mxu0 0.0
        %898 = vmatprep.mubr.f32.mxu0 0.0
        %899 = vmatmul.mubr.f32.gmra.mrb[0].mxu0 %v284
        %v900 = vpop.f32.mrb[0].mxu0
        %v901 = vadd.f32 0.0, %v900
        %v902 = vpop.f32.mrb[0].mxu0
        %903 = vdwg.mxu0
        %904 = vmatprep.subr.mxu0 0.0
        %905 = vmatpush1.xpose.msra.mxu0 %v398
        %906 = vmatprep.subr.mxu0 0.0
        %907 = vmatpush1.xpose.msra.mxu0 %v399
        %908 = vmatprep.subr.mxu0 0.0
        %909 = vmatpush1.xpose.msra.mxu0 %v400
        %910 = vmatprep.subr.mxu0 0.0
        %911 = vmatpush1.xpose.msra.mxu0 %v401
        %912 = vmatprep.subr.mxu0 0.0
        %913 = vmatpush1.xpose.msra.mxu0 %v402
        %914 = vmatprep.subr.mxu0 0.0
        %915 = vmatpush1.xpose.msra.mxu0 %v403
        %916 = vmatprep.subr.mxu0 0.0
        %917 = vmatpush1.xpose.msra.mxu0 %v404
        %918 = vmatprep.subr.mxu0 0.0
        %919 = vmatpush1.xpose.msra.mxu0 %v405
        %920 = vmatprep.subr.mxu0 0.0
        %921 = vmatpush1.xpose.msra.mxu0 %v406
        %922 = vmatprep.subr.mxu0 0.0
        %923 = vmatpush1.xpose.msra.mxu0 %v407
        %924 = vmatprep.subr.mxu0 0.0
        %925 = vmatpush1.xpose.msra.mxu0 %v408
        %926 = vmatprep.subr.mxu0 0.0
        %927 = vmatpush1.xpose.msra.mxu0 %v409
        %928 = vmatprep.subr.mxu0 0.0
        %929 = vmatpush1.xpose.msra.mxu0 %v410
        %930 = vmatprep.subr.mxu0 0.0
        %931 = vmatpush1.xpose.msra.mxu0 %v411
        %932 = vmatprep.subr.mxu0 0.0
        %933 = vmatpush1.xpose.msra.mxu0 %v412
        %934 = vmatprep.subr.mxu0 0.0
        %935 = vmatpush1.xpose.msra.mxu0 %v413
        %936 = vmatprep.subr.mxu0 0.0
        %937 = vmatpush1.xpose.msra.mxu0 0.0
        %938 = vmatprep.subr.mxu0 0.0
        %939 = vmatpush1.xpose.msra.mxu0 0.0
        %940 = vmatprep.subr.mxu0 0.0
        %941 = vmatpush1.xpose.msra.mxu0 0.0
        %942 = vmatprep.subr.mxu0 0.0
        %943 = vmatpush1.xpose.msra.mxu0 0.0
        %944 = vmatprep.subr.mxu0 0.0
        %945 = vmatpush1.xpose.msra.mxu0 0.0
        %946 = vmatprep.subr.mxu0 0.0
        %947 = vmatpush1.xpose.msra.mxu0 0.0
        %948 = vmatprep.subr.mxu0 0.0
        %949 = vmatpush1.xpose.msra.mxu0 0.0
        %950 = vmatprep.subr.mxu0 0.0
        %951 = vmatpush1.xpose.msra.mxu0 0.0
        %952 = vmatprep.subr.mxu0 0.0
        %953 = vmatpush1.xpose.msra.mxu0 0.0
        %954 = vmatprep.subr.mxu0 0.0
        %955 = vmatpush1.xpose.msra.mxu0 0.0
        %956 = vmatprep.subr.mxu0 0.0
        %957 = vmatpush1.xpose.msra.mxu0 0.0
        %958 = vmatprep.subr.mxu0 0.0
        %959 = vmatpush1.xpose.msra.mxu0 0.0
        %960 = vmatprep.subr.mxu0 0.0
        %961 = vmatpush1.xpose.msra.mxu0 0.0
        %962 = vmatprep.subr.mxu0 0.0
        %963 = vmatpush1.xpose.msra.mxu0 0.0
        %964 = vmatprep.subr.mxu0 0.0
        %965 = vmatpush1.xpose.msra.mxu0 0.0
        %966 = vmatprep.subr.mxu0 0.0
        %967 = vmatpush1.xpose.msra.mxu0 0.0
        %968 = vmatprep.mubr.f32.mxu0 0.0
        %969 = vmatmul.mubr.f32.gmra.mrb[0].mxu0 %v285
        %v970 = vpop.f32.mrb[0].mxu0
        %v971 = vadd.f32 0.0, %v970
        %v972 = vpop.f32.mrb[0].mxu0
        %973 = vdwg.mxu0
        %974 = vmax.xlane.f32.xlu0 %v481
        %v975 = vpop.xlane.xlu0 %974
        %976 = vmax.xlane.f32.xlu0 %v551
        %v977 = vpop.xlane.xlu0 %976
        %978 = vmax.xlane.f32.xlu0 %v621
        %v979 = vpop.xlane.xlu0 %978
        %980 = vmax.xlane.f32.xlu0 %v691
        %v981 = vpop.xlane.xlu0 %980
        %982 = vmax.xlane.f32.xlu0 %v761
        %v983 = vpop.xlane.xlu0 %982
        %984 = vmax.xlane.f32.xlu0 %v831
        %v985 = vpop.xlane.xlu0 %984
        %986 = vmax.xlane.f32.xlu0 %v901
        %v987 = vpop.xlane.xlu0 %986
        %988 = vmax.xlane.f32.xlu0 %v971
        %v989 = vpop.xlane.xlu0 %988
        %v990 = vsub.f32 %v481, %v975
        %v991 = vsub.f32 %v551, %v977
        %v992 = vsub.f32 %v621, %v979
        %v993 = vsub.f32 %v691, %v981
        %v994 = vsub.f32 %v761, %v983
        %v995 = vsub.f32 %v831, %v985
        %v996 = vsub.f32 %v901, %v987
        %v997 = vsub.f32 %v971, %v989
        %v998 = vmul.f32 %v990, 1.442695
        %v999 = vpow.pop %v998
        %v1000 = vmul.f32 %v991, 1.442695
        %v1001 = vpow.pop %v1000
        %v1002 = vmul.f32 %v992, 1.442695
        %v1003 = vpow.pop %v1002
        %v1004 = vmul.f32 %v993, 1.442695
        %v1005 = vpow.pop %v1004
        %v1006 = vmul.f32 %v994, 1.442695
        %v1007 = vpow.pop %v1006
        %v1008 = vmul.f32 %v995, 1.442695
        %v1009 = vpow.pop %v1008
        %v1010 = vmul.f32 %v996, 1.442695
        %v1011 = vpow.pop %v1010
        %v1012 = vmul.f32 %v997, 1.442695
        %v1013 = vpow.pop %v1012
        %1014 = vadd.xlane.f32.xlu0 %v999
        %v1015 = vpop.xlane.xlu0 %1014
        %1016 = vadd.xlane.f32.xlu0 %v1001
        %v1017 = vpop.xlane.xlu0 %1016
        %1018 = vadd.xlane.f32.xlu0 %v1003
        %v1019 = vpop.xlane.xlu0 %1018
        %1020 = vadd.xlane.f32.xlu0 %v1005
        %v1021 = vpop.xlane.xlu0 %1020
        %1022 = vadd.xlane.f32.xlu0 %v1007
        %v1023 = vpop.xlane.xlu0 %1022
        %1024 = vadd.xlane.f32.xlu0 %v1009
        %v1025 = vpop.xlane.xlu0 %1024
        %1026 = vadd.xlane.f32.xlu0 %v1011
        %v1027 = vpop.xlane.xlu0 %1026
        %1028 = vadd.xlane.f32.xlu0 %v1013
        %v1029 = vpop.xlane.xlu0 %1028
        %v1030 = vrcp.pop %v1015
        %v1031 = vmul.f32 1.0, %v1030
        %v1032 = vrcp.pop %v1017
        %v1033 = vmul.f32 1.0, %v1032
        %v1034 = vrcp.pop %v1019
        %v1035 = vmul.f32 1.0, %v1034
        %v1036 = vrcp.pop %v1021
        %v1037 = vmul.f32 1.0, %v1036
        %v1038 = vrcp.pop %v1023
        %v1039 = vmul.f32 1.0, %v1038
        %v1040 = vrcp.pop %v1025
        %v1041 = vmul.f32 1.0, %v1040
        %v1042 = vrcp.pop %v1027
        %v1043 = vmul.f32 1.0, %v1042
        %v1044 = vrcp.pop %v1029
        %v1045 = vmul.f32 1.0, %v1044
        %v1046 = vmul.f32 %v999, %v1031
        %v1047 = vmul.f32 %v1001, %v1033
        %v1048 = vmul.f32 %v1003, %v1035
        %v1049 = vmul.f32 %v1005, %v1037
        %v1050 = vmul.f32 %v1007, %v1039
        %v1051 = vmul.f32 %v1009, %v1041
        %v1052 = vmul.f32 %v1011, %v1043
        %v1053 = vmul.f32 %v1013, %v1045
        %1054 = vmatprep.subr.mxu0 0.0
        %1055 = vmatpush1.msra.mxu0 %v286
        %1056 = vmatprep.subr.mxu0 0.0
        %1057 = vmatpush1.msra.mxu0 %v287
        %1058 = vmatprep.subr.mxu0 0.0
        %1059 = vmatpush1.msra.mxu0 %v288
        %1060 = vmatprep.subr.mxu0 0.0
        %1061 = vmatpush1.msra.mxu0 %v289
        %1062 = vmatprep.subr.mxu0 0.0
        %1063 = vmatpush1.msra.mxu0 %v290
        %1064 = vmatprep.subr.mxu0 0.0
        %1065 = vmatpush1.msra.mxu0 %v291
        %1066 = vmatprep.subr.mxu0 0.0
        %1067 = vmatpush1.msra.mxu0 %v292
        %1068 = vmatprep.subr.mxu0 0.0
        %1069 = vmatpush1.msra.mxu0 %v293
        %1070 = vmatprep.subr.mxu0 0.0
        %1071 = vmatpush1.msra.mxu0 %v294
        %1072 = vmatprep.subr.mxu0 0.0
        %1073 = vmatpush1.msra.mxu0 %v295
        %1074 = vmatprep.subr.mxu0 0.0
        %1075 = vmatpush1.msra.mxu0 %v296
        %1076 = vmatprep.subr.mxu0 0.0
        %1077 = vmatpush1.msra.mxu0 %v297
        %1078 = vmatprep.subr.mxu0 0.0
        %1079 = vmatpush1.msra.mxu0 %v298
        %1080 = vmatprep.subr.mxu0 0.0
        %1081 = vmatpush1.msra.mxu0 %v299
        %1082 = vmatprep.subr.mxu0 0.0
        %1083 = vmatpush1.msra.mxu0 %v300
        %1084 = vmatprep.subr.mxu0 0.0
        %1085 = vmatpush1.msra.mxu0 %v301
        %1086 = vmatprep.subr.mxu0 0.0
        %1087 = vmatpush1.msra.mxu0 0.0
        %1088 = vmatprep.subr.mxu0 0.0
        %1089 = vmatpush1.msra.mxu0 0.0
        %1090 = vmatprep.subr.mxu0 0.0
        %1091 = vmatpush1.msra.mxu0 0.0
        %1092 = vmatprep.subr.mxu0 0.0
        %1093 = vmatpush1.msra.mxu0 0.0
        %1094 = vmatprep.subr.mxu0 0.0
        %1095 = vmatpush1.msra.mxu0 0.0
        %1096 = vmatprep.subr.mxu0 0.0
        %1097 = vmatpush1.msra.mxu0 0.0
        %1098 = vmatprep.subr.mxu0 0.0
        %1099 = vmatpush1.msra.mxu0 0.0
        %1100 = vmatprep.subr.mxu0 0.0
        %1101 = vmatpush1.msra.mxu0 0.0
        %1102 = vmatprep.subr.mxu0 0.0
        %1103 = vmatpush1.msra.mxu0 0.0
        %1104 = vmatprep.subr.mxu0 0.0
        %1105 = vmatpush1.msra.mxu0 0.0
        %1106 = vmatprep.subr.mxu0 0.0
        %1107 = vmatpush1.msra.mxu0 0.0
        %1108 = vmatprep.subr.mxu0 0.0
        %1109 = vmatpush1.msra.mxu0 0.0
        %1110 = vmatprep.subr.mxu0 0.0
        %1111 = vmatpush1.msra.mxu0 0.0
        %1112 = vmatprep.subr.mxu0 0.0
        %1113 = vmatpush1.msra.mxu0 0.0
        %1114 = vmatprep.subr.mxu0 0.0
        %1115 = vmatpush1.msra.mxu0 0.0
        %1116 = vmatprep.subr.mxu0 0.0
        %1117 = vmatpush1.msra.mxu0 0.0
        %1118 = vmatprep.mubr.f32.mxu0 0.0
        %1119 = vmatmul.mubr.f32.gmra.mrb[0].mxu0 %v1046
        %v1120 = vpop.f32.mrb[0].mxu0
        %v1121 = vadd.f32 0.0, %v1120
        %v1122 = vpop.f32.mrb[0].mxu0
        %1123 = vdwg.mxu0
        %1124 = vmatprep.subr.mxu0 0.0
        %1125 = vmatpush1.msra.mxu0 %v302
        %1126 = vmatprep.subr.mxu0 0.0
        %1127 = vmatpush1.msra.mxu0 %v303
        %1128 = vmatprep.subr.mxu0 0.0
        %1129 = vmatpush1.msra.mxu0 %v304
        %1130 = vmatprep.subr.mxu0 0.0
        %1131 = vmatpush1.msra.mxu0 %v305
        %1132 = vmatprep.subr.mxu0 0.0
        %1133 = vmatpush1.msra.mxu0 %v306
        %1134 = vmatprep.subr.mxu0 0.0
        %1135 = vmatpush1.msra.mxu0 %v307
        %1136 = vmatprep.subr.mxu0 0.0
        %1137 = vmatpush1.msra.mxu0 %v308
        %1138 = vmatprep.subr.mxu0 0.0
        %1139 = vmatpush1.msra.mxu0 %v309
        %1140 = vmatprep.subr.mxu0 0.0
        %1141 = vmatpush1.msra.mxu0 %v310
        %1142 = vmatprep.subr.mxu0 0.0
        %1143 = vmatpush1.msra.mxu0 %v311
        %1144 = vmatprep.subr.mxu0 0.0
        %1145 = vmatpush1.msra.mxu0 %v312
        %1146 = vmatprep.subr.mxu0 0.0
        %1147 = vmatpush1.msra.mxu0 %v313
        %1148 = vmatprep.subr.mxu0 0.0
        %1149 = vmatpush1.msra.mxu0 %v314
        %1150 = vmatprep.subr.mxu0 0.0
        %1151 = vmatpush1.msra.mxu0 %v315
        %1152 = vmatprep.subr.mxu0 0.0
        %1153 = vmatpush1.msra.mxu0 %v316
        %1154 = vmatprep.subr.mxu0 0.0
        %1155 = vmatpush1.msra.mxu0 %v317
        %1156 = vmatprep.subr.mxu0 0.0
        %1157 = vmatpush1.msra.mxu0 0.0
        %1158 = vmatprep.subr.mxu0 0.0
        %1159 = vmatpush1.msra.mxu0 0.0
        %1160 = vmatprep.subr.mxu0 0.0
        %1161 = vmatpush1.msra.mxu0 0.0
        %1162 = vmatprep.subr.mxu0 0.0
        %1163 = vmatpush1.msra.mxu0 0.0
        %1164 = vmatprep.subr.mxu0 0.0
        %1165 = vmatpush1.msra.mxu0 0.0
        %1166 = vmatprep.subr.mxu0 0.0
        %1167 = vmatpush1.msra.mxu0 0.0
        %1168 = vmatprep.subr.mxu0 0.0
        %1169 = vmatpush1.msra.mxu0 0.0
        %1170 = vmatprep.subr.mxu0 0.0
        %1171 = vmatpush1.msra.mxu0 0.0
        %1172 = vmatprep.subr.mxu0 0.0
        %1173 = vmatpush1.msra.mxu0 0.0
        %1174 = vmatprep.subr.mxu0 0.0
        %1175 = vmatpush1.msra.mxu0 0.0
        %1176 = vmatprep.subr.mxu0 0.0
        %1177 = vmatpush1.msra.mxu0 0.0
        %1178 = vmatprep.subr.mxu0 0.0
        %1179 = vmatpush1.msra.mxu0 0.0
        %1180 = vmatprep.subr.mxu0 0.0
        %1181 = vmatpush1.msra.mxu0 0.0
        %1182 = vmatprep.subr.mxu0 0.0
        %1183 = vmatpush1.msra.mxu0 0.0
        %1184 = vmatprep.subr.mxu0 0.0
        %1185 = vmatpush1.msra.mxu0 0.0
        %1186 = vmatprep.subr.mxu0 0.0
        %1187 = vmatpush1.msra.mxu0 0.0
        %1188 = vmatprep.mubr.f32.mxu0 0.0
        %1189 = vmatmul.mubr.f32.gmra.mrb[0].mxu0 %v1047
        %v1190 = vpop.f32.mrb[0].mxu0
        %v1191 = vadd.f32 0.0, %v1190
        %v1192 = vpop.f32.mrb[0].mxu0
        %1193 = vdwg.mxu0
        %1194 = vmatprep.subr.mxu0 0.0
        %1195 = vmatpush1.msra.mxu0 %v318
        %1196 = vmatprep.subr.mxu0 0.0
        %1197 = vmatpush1.msra.mxu0 %v319
        %1198 = vmatprep.subr.mxu0 0.0
        %1199 = vmatpush1.msra.mxu0 %v320
        %1200 = vmatprep.subr.mxu0 0.0
        %1201 = vmatpush1.msra.mxu0 %v321
        %1202 = vmatprep.subr.mxu0 0.0
        %1203 = vmatpush1.msra.mxu0 %v322
        %1204 = vmatprep.subr.mxu0 0.0
        %1205 = vmatpush1.msra.mxu0 %v323
        %1206 = vmatprep.subr.mxu0 0.0
        %1207 = vmatpush1.msra.mxu0 %v324
        %1208 = vmatprep.subr.mxu0 0.0
        %1209 = vmatpush1.msra.mxu0 %v325
        %1210 = vmatprep.subr.mxu0 0.0
        %1211 = vmatpush1.msra.mxu0 %v326
        %1212 = vmatprep.subr.mxu0 0.0
        %1213 = vmatpush1.msra.mxu0 %v327
        %1214 = vmatprep.subr.mxu0 0.0
        %1215 = vmatpush1.msra.mxu0 %v328
        %1216 = vmatprep.subr.mxu0 0.0
        %1217 = vmatpush1.msra.mxu0 %v329
        %1218 = vmatprep.subr.mxu0 0.0
        %1219 = vmatpush1.msra.mxu0 %v330
        %1220 = vmatprep.subr.mxu0 0.0
        %1221 = vmatpush1.msra.mxu0 %v331
        %1222 = vmatprep.subr.mxu0 0.0
        %1223 = vmatpush1.msra.mxu0 %v332
        %1224 = vmatprep.subr.mxu0 0.0
        %1225 = vmatpush1.msra.mxu0 %v333
        %1226 = vmatprep.subr.mxu0 0.0
        %1227 = vmatpush1.msra.mxu0 0.0
        %1228 = vmatprep.subr.mxu0 0.0
        %1229 = vmatpush1.msra.mxu0 0.0
        %1230 = vmatprep.subr.mxu0 0.0
        %1231 = vmatpush1.msra.mxu0 0.0
        %1232 = vmatprep.subr.mxu0 0.0
        %1233 = vmatpush1.msra.mxu0 0.0
        %1234 = vmatprep.subr.mxu0 0.0
        %1235 = vmatpush1.msra.mxu0 0.0
        %1236 = vmatprep.subr.mxu0 0.0
        %1237 = vmatpush1.msra.mxu0 0.0
        %1238 = vmatprep.subr.mxu0 0.0
        %1239 = vmatpush1.msra.mxu0 0.0
        %1240 = vmatprep.subr.mxu0 0.0
        %1241 = vmatpush1.msra.mxu0 0.0
        %1242 = vmatprep.subr.mxu0 0.0
        %1243 = vmatpush1.msra.mxu0 0.0
        %1244 = vmatprep.subr.mxu0 0.0
        %1245 = vmatpush1.msra.mxu0 0.0
        %1246 = vmatprep.subr.mxu0 0.0
        %1247 = vmatpush1.msra.mxu0 0.0
        %1248 = vmatprep.subr.mxu0 0.0
        %1249 = vmatpush1.msra.mxu0 0.0
        %1250 = vmatprep.subr.mxu0 0.0
        %1251 = vmatpush1.msra.mxu0 0.0
        %1252 = vmatprep.subr.mxu0 0.0
        %1253 = vmatpush1.msra.mxu0 0.0
        %1254 = vmatprep.subr.mxu0 0.0
        %1255 = vmatpush1.msra.mxu0 0.0
        %1256 = vmatprep.subr.mxu0 0.0
        %1257 = vmatpush1.msra.mxu0 0.0
        %1258 = vmatprep.mubr.f32.mxu0 0.0
        %1259 = vmatmul.mubr.f32.gmra.mrb[0].mxu0 %v1048
        %v1260 = vpop.f32.mrb[0].mxu0
        %v1261 = vadd.f32 0.0, %v1260
        %v1262 = vpop.f32.mrb[0].mxu0
        %1263 = vdwg.mxu0
        %1264 = vmatprep.subr.mxu0 0.0
        %1265 = vmatpush1.msra.mxu0 %v334
        %1266 = vmatprep.subr.mxu0 0.0
        %1267 = vmatpush1.msra.mxu0 %v335
        %1268 = vmatprep.subr.mxu0 0.0
        %1269 = vmatpush1.msra.mxu0 %v336
        %1270 = vmatprep.subr.mxu0 0.0
        %1271 = vmatpush1.msra.mxu0 %v337
        %1272 = vmatprep.subr.mxu0 0.0
        %1273 = vmatpush1.msra.mxu0 %v338
        %1274 = vmatprep.subr.mxu0 0.0
        %1275 = vmatpush1.msra.mxu0 %v339
        %1276 = vmatprep.subr.mxu0 0.0
        %1277 = vmatpush1.msra.mxu0 %v340
        %1278 = vmatprep.subr.mxu0 0.0
        %1279 = vmatpush1.msra.mxu0 %v341
        %1280 = vmatprep.subr.mxu0 0.0
        %1281 = vmatpush1.msra.mxu0 %v342
        %1282 = vmatprep.subr.mxu0 0.0
        %1283 = vmatpush1.msra.mxu0 %v343
        %1284 = vmatprep.subr.mxu0 0.0
        %1285 = vmatpush1.msra.mxu0 %v344
        %1286 = vmatprep.subr.mxu0 0.0
        %1287 = vmatpush1.msra.mxu0 %v345
        %1288 = vmatprep.subr.mxu0 0.0
        %1289 = vmatpush1.msra.mxu0 %v346
        %1290 = vmatprep.subr.mxu0 0.0
        %1291 = vmatpush1.msra.mxu0 %v347
        %1292 = vmatprep.subr.mxu0 0.0
        %1293 = vmatpush1.msra.mxu0 %v348
        %1294 = vmatprep.subr.mxu0 0.0
        %1295 = vmatpush1.msra.mxu0 %v349
        %1296 = vmatprep.subr.mxu0 0.0
        %1297 = vmatpush1.msra.mxu0 0.0
        %1298 = vmatprep.subr.mxu0 0.0
        %1299 = vmatpush1.msra.mxu0 0.0
        %1300 = vmatprep.subr.mxu0 0.0
        %1301 = vmatpush1.msra.mxu0 0.0
        %1302 = vmatprep.subr.mxu0 0.0
        %1303 = vmatpush1.msra.mxu0 0.0
        %1304 = vmatprep.subr.mxu0 0.0
        %1305 = vmatpush1.msra.mxu0 0.0
        %1306 = vmatprep.subr.mxu0 0.0
        %1307 = vmatpush1.msra.mxu0 0.0
        %1308 = vmatprep.subr.mxu0 0.0
        %1309 = vmatpush1.msra.mxu0 0.0
        %1310 = vmatprep.subr.mxu0 0.0
        %1311 = vmatpush1.msra.mxu0 0.0
        %1312 = vmatprep.subr.mxu0 0.0
        %1313 = vmatpush1.msra.mxu0 0.0
        %1314 = vmatprep.subr.mxu0 0.0
        %1315 = vmatpush1.msra.mxu0 0.0
        %1316 = vmatprep.subr.mxu0 0.0
        %1317 = vmatpush1.msra.mxu0 0.0
        %1318 = vmatprep.subr.mxu0 0.0
        %1319 = vmatpush1.msra.mxu0 0.0
        %1320 = vmatprep.subr.mxu0 0.0
        %1321 = vmatpush1.msra.mxu0 0.0
        %1322 = vmatprep.subr.mxu0 0.0
        %1323 = vmatpush1.msra.mxu0 0.0
        %1324 = vmatprep.subr.mxu0 0.0
        %1325 = vmatpush1.msra.mxu0 0.0
        %1326 = vmatprep.subr.mxu0 0.0
        %1327 = vmatpush1.msra.mxu0 0.0
        %1328 = vmatprep.mubr.f32.mxu0 0.0
        %1329 = vmatmul.mubr.f32.gmra.mrb[0].mxu0 %v1049
        %v1330 = vpop.f32.mrb[0].mxu0
        %v1331 = vadd.f32 0.0, %v1330
        %v1332 = vpop.f32.mrb[0].mxu0
        %1333 = vdwg.mxu0
        %1334 = vmatprep.subr.mxu0 0.0
        %1335 = vmatpush1.msra.mxu0 %v350
        %1336 = vmatprep.subr.mxu0 0.0
        %1337 = vmatpush1.msra.mxu0 %v351
        %1338 = vmatprep.subr.mxu0 0.0
        %1339 = vmatpush1.msra.mxu0 %v352
        %1340 = vmatprep.subr.mxu0 0.0
        %1341 = vmatpush1.msra.mxu0 %v353
        %1342 = vmatprep.subr.mxu0 0.0
        %1343 = vmatpush1.msra.mxu0 %v354
        %1344 = vmatprep.subr.mxu0 0.0
        %1345 = vmatpush1.msra.mxu0 %v355
        %1346 = vmatprep.subr.mxu0 0.0
        %1347 = vmatpush1.msra.mxu0 %v356
        %1348 = vmatprep.subr.mxu0 0.0
        %1349 = vmatpush1.msra.mxu0 %v357
        %1350 = vmatprep.subr.mxu0 0.0
        %1351 = vmatpush1.msra.mxu0 %v358
        %1352 = vmatprep.subr.mxu0 0.0
        %1353 = vmatpush1.msra.mxu0 %v359
        %1354 = vmatprep.subr.mxu0 0.0
        %1355 = vmatpush1.msra.mxu0 %v360
        %1356 = vmatprep.subr.mxu0 0.0
        %1357 = vmatpush1.msra.mxu0 %v361
        %1358 = vmatprep.subr.mxu0 0.0
        %1359 = vmatpush1.msra.mxu0 %v362
        %1360 = vmatprep.subr.mxu0 0.0
        %1361 = vmatpush1.msra.mxu0 %v363
        %1362 = vmatprep.subr.mxu0 0.0
        %1363 = vmatpush1.msra.mxu0 %v364
        %1364 = vmatprep.subr.mxu0 0.0
        %1365 = vmatpush1.msra.mxu0 %v365
        %1366 = vmatprep.subr.mxu0 0.0
        %1367 = vmatpush1.msra.mxu0 0.0
        %1368 = vmatprep.subr.mxu0 0.0
        %1369 = vmatpush1.msra.mxu0 0.0
        %1370 = vmatprep.subr.mxu0 0.0
        %1371 = vmatpush1.msra.mxu0 0.0
        %1372 = vmatprep.subr.mxu0 0.0
        %1373 = vmatpush1.msra.mxu0 0.0
        %1374 = vmatprep.subr.mxu0 0.0
        %1375 = vmatpush1.msra.mxu0 0.0
        %1376 = vmatprep.subr.mxu0 0.0
        %1377 = vmatpush1.msra.mxu0 0.0
        %1378 = vmatprep.subr.mxu0 0.0
        %1379 = vmatpush1.msra.mxu0 0.0
        %1380 = vmatprep.subr.mxu0 0.0
        %1381 = vmatpush1.msra.mxu0 0.0
        %1382 = vmatprep.subr.mxu0 0.0
        %1383 = vmatpush1.msra.mxu0 0.0
        %1384 = vmatprep.subr.mxu0 0.0
        %1385 = vmatpush1.msra.mxu0 0.0
        %1386 = vmatprep.subr.mxu0 0.0
        %1387 = vmatpush1.msra.mxu0 0.0
        %1388 = vmatprep.subr.mxu0 0.0
        %1389 = vmatpush1.msra.mxu0 0.0
        %1390 = vmatprep.subr.mxu0 0.0
        %1391 = vmatpush1.msra.mxu0 0.0
        %1392 = vmatprep.subr.mxu0 0.0
        %1393 = vmatpush1.msra.mxu0 0.0
        %1394 = vmatprep.subr.mxu0 0.0
        %1395 = vmatpush1.msra.mxu0 0.0
        %1396 = vmatprep.subr.mxu0 0.0
        %1397 = vmatpush1.msra.mxu0 0.0
        %1398 = vmatprep.mubr.f32.mxu0 0.0
        %1399 = vmatmul.mubr.f32.gmra.mrb[0].mxu0 %v1050
        %v1400 = vpop.f32.mrb[0].mxu0
        %v1401 = vadd.f32 0.0, %v1400
        %v1402 = vpop.f32.mrb[0].mxu0
        %1403 = vdwg.mxu0
        %1404 = vmatprep.subr.mxu0 0.0
        %1405 = vmatpush1.msra.mxu0 %v366
        %1406 = vmatprep.subr.mxu0 0.0
        %1407 = vmatpush1.msra.mxu0 %v367
        %1408 = vmatprep.subr.mxu0 0.0
        %1409 = vmatpush1.msra.mxu0 %v368
        %1410 = vmatprep.subr.mxu0 0.0
        %1411 = vmatpush1.msra.mxu0 %v369
        %1412 = vmatprep.subr.mxu0 0.0
        %1413 = vmatpush1.msra.mxu0 %v370
        %1414 = vmatprep.subr.mxu0 0.0
        %1415 = vmatpush1.msra.mxu0 %v371
        %1416 = vmatprep.subr.mxu0 0.0
        %1417 = vmatpush1.msra.mxu0 %v372
        %1418 = vmatprep.subr.mxu0 0.0
        %1419 = vmatpush1.msra.mxu0 %v373
        %1420 = vmatprep.subr.mxu0 0.0
        %1421 = vmatpush1.msra.mxu0 %v374
        %1422 = vmatprep.subr.mxu0 0.0
        %1423 = vmatpush1.msra.mxu0 %v375
        %1424 = vmatprep.subr.mxu0 0.0
        %1425 = vmatpush1.msra.mxu0 %v376
        %1426 = vmatprep.subr.mxu0 0.0
        %1427 = vmatpush1.msra.mxu0 %v377
        %1428 = vmatprep.subr.mxu0 0.0
        %1429 = vmatpush1.msra.mxu0 %v378
        %1430 = vmatprep.subr.mxu0 0.0
        %1431 = vmatpush1.msra.mxu0 %v379
        %1432 = vmatprep.subr.mxu0 0.0
        %1433 = vmatpush1.msra.mxu0 %v380
        %1434 = vmatprep.subr.mxu0 0.0
        %1435 = vmatpush1.msra.mxu0 %v381
        %1436 = vmatprep.subr.mxu0 0.0
        %1437 = vmatpush1.msra.mxu0 0.0
        %1438 = vmatprep.subr.mxu0 0.0
        %1439 = vmatpush1.msra.mxu0 0.0
        %1440 = vmatprep.subr.mxu0 0.0
        %1441 = vmatpush1.msra.mxu0 0.0
        %1442 = vmatprep.subr.mxu0 0.0
        %1443 = vmatpush1.msra.mxu0 0.0
        %1444 = vmatprep.subr.mxu0 0.0
        %1445 = vmatpush1.msra.mxu0 0.0
        %1446 = vmatprep.subr.mxu0 0.0
        %1447 = vmatpush1.msra.mxu0 0.0
        %1448 = vmatprep.subr.mxu0 0.0
        %1449 = vmatpush1.msra.mxu0 0.0
        %1450 = vmatprep.subr.mxu0 0.0
        %1451 = vmatpush1.msra.mxu0 0.0
        %1452 = vmatprep.subr.mxu0 0.0
        %1453 = vmatpush1.msra.mxu0 0.0
        %1454 = vmatprep.subr.mxu0 0.0
        %1455 = vmatpush1.msra.mxu0 0.0
        %1456 = vmatprep.subr.mxu0 0.0
        %1457 = vmatpush1.msra.mxu0 0.0
        %1458 = vmatprep.subr.mxu0 0.0
        %1459 = vmatpush1.msra.mxu0 0.0
        %1460 = vmatprep.subr.mxu0 0.0
        %1461 = vmatpush1.msra.mxu0 0.0
        %1462 = vmatprep.subr.mxu0 0.0
        %1463 = vmatpush1.msra.mxu0 0.0
        %1464 = vmatprep.subr.mxu0 0.0
        %1465 = vmatpush1.msra.mxu0 0.0
        %1466 = vmatprep.subr.mxu0 0.0
        %1467 = vmatpush1.msra.mxu0 0.0
        %1468 = vmatprep.mubr.f32.mxu0 0.0
        %1469 = vmatmul.mubr.f32.gmra.mrb[0].mxu0 %v1051
        %v1470 = vpop.f32.mrb[0].mxu0
        %v1471 = vadd.f32 0.0, %v1470
        %v1472 = vpop.f32.mrb[0].mxu0
        %1473 = vdwg.mxu0
        %1474 = vmatprep.subr.mxu0 0.0
        %1475 = vmatpush1.msra.mxu0 %v382
        %1476 = vmatprep.subr.mxu0 0.0
        %1477 = vmatpush1.msra.mxu0 %v383
        %1478 = vmatprep.subr.mxu0 0.0
        %1479 = vmatpush1.msra.mxu0 %v384
        %1480 = vmatprep.subr.mxu0 0.0
        %1481 = vmatpush1.msra.mxu0 %v385
        %1482 = vmatprep.subr.mxu0 0.0
        %1483 = vmatpush1.msra.mxu0 %v386
        %1484 = vmatprep.subr.mxu0 0.0
        %1485 = vmatpush1.msra.mxu0 %v387
        %1486 = vmatprep.subr.mxu0 0.0
        %1487 = vmatpush1.msra.mxu0 %v388
        %1488 = vmatprep.subr.mxu0 0.0
        %1489 = vmatpush1.msra.mxu0 %v389
        %1490 = vmatprep.subr.mxu0 0.0
        %1491 = vmatpush1.msra.mxu0 %v390
        %1492 = vmatprep.subr.mxu0 0.0
        %1493 = vmatpush1.msra.mxu0 %v391
        %1494 = vmatprep.subr.mxu0 0.0
        %1495 = vmatpush1.msra.mxu0 %v392
        %1496 = vmatprep.subr.mxu0 0.0
        %1497 = vmatpush1.msra.mxu0 %v393
        %1498 = vmatprep.subr.mxu0 0.0
        %1499 = vmatpush1.msra.mxu0 %v394
        %1500 = vmatprep.subr.mxu0 0.0
        %1501 = vmatpush1.msra.mxu0 %v395
        %1502 = vmatprep.subr.mxu0 0.0
        %1503 = vmatpush1.msra.mxu0 %v396
        %1504 = vmatprep.subr.mxu0 0.0
        %1505 = vmatpush1.msra.mxu0 %v397
        %1506 = vmatprep.subr.mxu0 0.0
        %1507 = vmatpush1.msra.mxu0 0.0
        %1508 = vmatprep.subr.mxu0 0.0
        %1509 = vmatpush1.msra.mxu0 0.0
        %1510 = vmatprep.subr.mxu0 0.0
        %1511 = vmatpush1.msra.mxu0 0.0
        %1512 = vmatprep.subr.mxu0 0.0
        %1513 = vmatpush1.msra.mxu0 0.0
        %1514 = vmatprep.subr.mxu0 0.0
        %1515 = vmatpush1.msra.mxu0 0.0
        %1516 = vmatprep.subr.mxu0 0.0
        %1517 = vmatpush1.msra.mxu0 0.0
        %1518 = vmatprep.subr.mxu0 0.0
        %1519 = vmatpush1.msra.mxu0 0.0
        %1520 = vmatprep.subr.mxu0 0.0
        %1521 = vmatpush1.msra.mxu0 0.0
        %1522 = vmatprep.subr.mxu0 0.0
        %1523 = vmatpush1.msra.mxu0 0.0
        %1524 = vmatprep.subr.mxu0 0.0
        %1525 = vmatpush1.msra.mxu0 0.0
        %1526 = vmatprep.subr.mxu0 0.0
        %1527 = vmatpush1.msra.mxu0 0.0
        %1528 = vmatprep.subr.mxu0 0.0
        %1529 = vmatpush1.msra.mxu0 0.0
        %1530 = vmatprep.subr.mxu0 0.0
        %1531 = vmatpush1.msra.mxu0 0.0
        %1532 = vmatprep.subr.mxu0 0.0
        %1533 = vmatpush1.msra.mxu0 0.0
        %1534 = vmatprep.subr.mxu0 0.0
        %1535 = vmatpush1.msra.mxu0 0.0
        %1536 = vmatprep.subr.mxu0 0.0
        %1537 = vmatpush1.msra.mxu0 0.0
        %1538 = vmatprep.mubr.f32.mxu0 0.0
        %1539 = vmatmul.mubr.f32.gmra.mrb[0].mxu0 %v1052
        %v1540 = vpop.f32.mrb[0].mxu0
        %v1541 = vadd.f32 0.0, %v1540
        %v1542 = vpop.f32.mrb[0].mxu0
        %1543 = vdwg.mxu0
        %1544 = vmatprep.subr.mxu0 0.0
        %1545 = vmatpush1.msra.mxu0 %v398
        %1546 = vmatprep.subr.mxu0 0.0
        %1547 = vmatpush1.msra.mxu0 %v399
        %1548 = vmatprep.subr.mxu0 0.0
        %1549 = vmatpush1.msra.mxu0 %v400
        %1550 = vmatprep.subr.mxu0 0.0
        %1551 = vmatpush1.msra.mxu0 %v401
        %1552 = vmatprep.subr.mxu0 0.0
        %1553 = vmatpush1.msra.mxu0 %v402
        %1554 = vmatprep.subr.mxu0 0.0
        %1555 = vmatpush1.msra.mxu0 %v403
        %1556 = vmatprep.subr.mxu0 0.0
        %1557 = vmatpush1.msra.mxu0 %v404
        %1558 = vmatprep.subr.mxu0 0.0
        %1559 = vmatpush1.msra.mxu0 %v405
        %1560 = vmatprep.subr.mxu0 0.0
        %1561 = vmatpush1.msra.mxu0 %v406
        %1562 = vmatprep.subr.mxu0 0.0
        %1563 = vmatpush1.msra.mxu0 %v407
        %1564 = vmatprep.subr.mxu0 0.0
        %1565 = vmatpush1.msra.mxu0 %v408
        %1566 = vmatprep.subr.mxu0 0.0
        %1567 = vmatpush1.msra.mxu0 %v409
        %1568 = vmatprep.subr.mxu0 0.0
        %1569 = vmatpush1.msra.mxu0 %v410
        %1570 = vmatprep.subr.mxu0 0.0
        %1571 = vmatpush1.msra.mxu0 %v411
        %1572 = vmatprep.subr.mxu0 0.0
        %1573 = vmatpush1.msra.mxu0 %v412
        %1574 = vmatprep.subr.mxu0 0.0
        %1575 = vmatpush1.msra.mxu0 %v413
        %1576 = vmatprep.subr.mxu0 0.0
        %1577 = vmatpush1.msra.mxu0 0.0
        %1578 = vmatprep.subr.mxu0 0.0
        %1579 = vmatpush1.msra.mxu0 0.0
        %1580 = vmatprep.subr.mxu0 0.0
        %1581 = vmatpush1.msra.mxu0 0.0
        %1582 = vmatprep.subr.mxu0 0.0
        %1583 = vmatpush1.msra.mxu0 0.0
        %1584 = vmatprep.subr.mxu0 0.0
        %1585 = vmatpush1.msra.mxu0 0.0
        %1586 = vmatprep.subr.mxu0 0.0
        %1587 = vmatpush1.msra.mxu0 0.0
        %1588 = vmatprep.subr.mxu0 0.0
        %1589 = vmatpush1.msra.mxu0 0.0
        %1590 = vmatprep.subr.mxu0 0.0
        %1591 = vmatpush1.msra.mxu0 0.0
        %1592 = vmatprep.subr.mxu0 0.0
        %1593 = vmatpush1.msra.mxu0 0.0
        %1594 = vmatprep.subr.mxu0 0.0
        %1595 = vmatpush1.msra.mxu0 0.0
        %1596 = vmatprep.subr.mxu0 0.0
        %1597 = vmatpush1.msra.mxu0 0.0
        %1598 = vmatprep.subr.mxu0 0.0
        %1599 = vmatpush1.msra.mxu0 0.0
        %1600 = vmatprep.subr.mxu0 0.0
        %1601 = vmatpush1.msra.mxu0 0.0
        %1602 = vmatprep.subr.mxu0 0.0
        %1603 = vmatpush1.msra.mxu0 0.0
        %1604 = vmatprep.subr.mxu0 0.0
        %1605 = vmatpush1.msra.mxu0 0.0
        %1606 = vmatprep.subr.mxu0 0.0
        %1607 = vmatpush1.msra.mxu0 0.0
        %1608 = vmatprep.mubr.f32.mxu0 0.0
        %1609 = vmatmul.mubr.f32.gmra.mrb[0].mxu0 %v1053
        %v1610 = vpop.f32.mrb[0].mxu0
        %v1611 = vadd.f32 0.0, %v1610
        %v1612 = vpop.f32.mrb[0].mxu0
        %1613 = vdwg.mxu0
        %v1614 = vld [vmem:[%s2] sm:$0xff]
        %v1615 = vld [vmem:[%s2 + $0x8] sm:$0xff]
        %v1616 = vld [vmem:[%s2 + $0x10] sm:$0xff]
        %v1617 = vld [vmem:[%s2 + $0x18] sm:$0xff]
        %v1618 = vld [vmem:[%s2 + $0x20] sm:$0xff]
        %v1619 = vld [vmem:[%s2 + $0x28] sm:$0xff]
        %v1620 = vld [vmem:[%s2 + $0x30] sm:$0xff]
        %v1621 = vld [vmem:[%s2 + $0x38] sm:$0xff]
        %v1622 = vld [vmem:[%s2 + $0x40] sm:$0xff]
        %v1623 = vld [vmem:[%s2 + $0x48] sm:$0xff]
        %v1624 = vld [vmem:[%s2 + $0x50] sm:$0xff]
        %v1625 = vld [vmem:[%s2 + $0x58] sm:$0xff]
        %v1626 = vld [vmem:[%s2 + $0x60] sm:$0xff]
        %v1627 = vld [vmem:[%s2 + $0x68] sm:$0xff]
        %v1628 = vld [vmem:[%s2 + $0x70] sm:$0xff]
        %v1629 = vld [vmem:[%s2 + $0x78] sm:$0xff]
        %v1630 = vld [vmem:[%s3] sm:$0xff]
        %v1631 = vld [vmem:[%s3 + $0x8] sm:$0xff]
        %v1632 = vld [vmem:[%s3 + $0x10] sm:$0xff]
        %v1633 = vld [vmem:[%s3 + $0x18] sm:$0xff]
        %v1634 = vld [vmem:[%s3 + $0x20] sm:$0xff]
        %v1635 = vld [vmem:[%s3 + $0x28] sm:$0xff]
        %v1636 = vld [vmem:[%s3 + $0x30] sm:$0xff]
        %v1637 = vld [vmem:[%s3 + $0x38] sm:$0xff]
        %v1638 = vld [vmem:[%s3 + $0x40] sm:$0xff]
        %v1639 = vld [vmem:[%s3 + $0x48] sm:$0xff]
        %v1640 = vld [vmem:[%s3 + $0x50] sm:$0xff]
        %v1641 = vld [vmem:[%s3 + $0x58] sm:$0xff]
        %v1642 = vld [vmem:[%s3 + $0x60] sm:$0xff]
        %v1643 = vld [vmem:[%s3 + $0x68] sm:$0xff]
        %v1644 = vld [vmem:[%s3 + $0x70] sm:$0xff]
        %v1645 = vld [vmem:[%s3 + $0x78] sm:$0xff]
        %1646 = vmatprep.subr.mxu0 0.0
        %1647 = vmatpush1.msra.mxu0 %v1630
        %1648 = vmatprep.subr.mxu0 0.0
        %1649 = vmatpush1.msra.mxu0 %v1631
        %1650 = vmatprep.subr.mxu0 0.0
        %1651 = vmatpush1.msra.mxu0 %v1632
        %1652 = vmatprep.subr.mxu0 0.0
        %1653 = vmatpush1.msra.mxu0 %v1633
        %1654 = vmatprep.subr.mxu0 0.0
        %1655 = vmatpush1.msra.mxu0 %v1634
        %1656 = vmatprep.subr.mxu0 0.0
        %1657 = vmatpush1.msra.mxu0 %v1635
        %1658 = vmatprep.subr.mxu0 0.0
        %1659 = vmatpush1.msra.mxu0 %v1636
        %1660 = vmatprep.subr.mxu0 0.0
        %1661 = vmatpush1.msra.mxu0 %v1637
        %1662 = vmatprep.subr.mxu0 0.0
        %1663 = vmatpush1.msra.mxu0 %v1638
        %1664 = vmatprep.subr.mxu0 0.0
        %1665 = vmatpush1.msra.mxu0 %v1639
        %1666 = vmatprep.subr.mxu0 0.0
        %1667 = vmatpush1.msra.mxu0 %v1640
        %1668 = vmatprep.subr.mxu0 0.0
        %1669 = vmatpush1.msra.mxu0 %v1641
        %1670 = vmatprep.subr.mxu0 0.0
        %1671 = vmatpush1.msra.mxu0 %v1642
        %1672 = vmatprep.subr.mxu0 0.0
        %1673 = vmatpush1.msra.mxu0 %v1643
        %1674 = vmatprep.subr.mxu0 0.0
        %1675 = vmatpush1.msra.mxu0 %v1644
        %1676 = vmatprep.subr.mxu0 0.0
        %1677 = vmatpush1.msra.mxu0 %v1645
        %1678 = vmatprep.subr.mxu0 0.0
        %1679 = vmatpush1.msra.mxu0 0.0
        %1680 = vmatprep.subr.mxu0 0.0
        %1681 = vmatpush1.msra.mxu0 0.0
        %1682 = vmatprep.subr.mxu0 0.0
        %1683 = vmatpush1.msra.mxu0 0.0
        %1684 = vmatprep.subr.mxu0 0.0
        %1685 = vmatpush1.msra.mxu0 0.0
        %1686 = vmatprep.subr.mxu0 0.0
        %1687 = vmatpush1.msra.mxu0 0.0
        %1688 = vmatprep.subr.mxu0 0.0
        %1689 = vmatpush1.msra.mxu0 0.0
        %1690 = vmatprep.subr.mxu0 0.0
        %1691 = vmatpush1.msra.mxu0 0.0
        %1692 = vmatprep.subr.mxu0 0.0
        %1693 = vmatpush1.msra.mxu0 0.0
        %1694 = vmatprep.subr.mxu0 0.0
        %1695 = vmatpush1.msra.mxu0 0.0
        %1696 = vmatprep.subr.mxu0 0.0
        %1697 = vmatpush1.msra.mxu0 0.0
        %1698 = vmatprep.subr.mxu0 0.0
        %1699 = vmatpush1.msra.mxu0 0.0
        %1700 = vmatprep.subr.mxu0 0.0
        %1701 = vmatpush1.msra.mxu0 0.0
        %1702 = vmatprep.subr.mxu0 0.0
        %1703 = vmatpush1.msra.mxu0 0.0
        %1704 = vmatprep.subr.mxu0 0.0
        %1705 = vmatpush1.msra.mxu0 0.0
        %1706 = vmatprep.subr.mxu0 0.0
        %1707 = vmatpush1.msra.mxu0 0.0
        %1708 = vmatprep.subr.mxu0 0.0
        %1709 = vmatpush1.msra.mxu0 0.0
        %1710 = vmatprep.mubr.f32.mxu0 0.0
        %1711 = vmatmul.mubr.f32.gmra.mrb[0].mxu0 %v278
        %v1712 = vpop.f32.mrb[0].mxu0
        %v1713 = vadd.f32 0.0, %v1712
        %v1714 = vpop.f32.mrb[0].mxu0
        %1715 = vmatprep.mubr.f32.mxu0 0.0
        %1716 = vmatmul.mubr.f32.gmra.mrb[0].mxu0 %v279
        %v1717 = vpop.f32.mrb[0].mxu0
        %v1718 = vadd.f32 0.0, %v1717
        %v1719 = vpop.f32.mrb[0].mxu0
        %1720 = vmatprep.mubr.f32.mxu0 0.0
        %1721 = vmatmul.mubr.f32.gmra.mrb[0].mxu0 %v280
        %v1722 = vpop.f32.mrb[0].mxu0
        %v1723 = vadd.f32 0.0, %v1722
        %v1724 = vpop.f32.mrb[0].mxu0
        %1725 = vmatprep.mubr.f32.mxu0 0.0
        %1726 = vmatmul.mubr.f32.gmra.mrb[0].mxu0 %v281
        %v1727 = vpop.f32.mrb[0].mxu0
        %v1728 = vadd.f32 0.0, %v1727
        %v1729 = vpop.f32.mrb[0].mxu0
        %1730 = vmatprep.mubr.f32.mxu0 0.0
        %1731 = vmatmul.mubr.f32.gmra.mrb[0].mxu0 %v282
        %v1732 = vpop.f32.mrb[0].mxu0
        %v1733 = vadd.f32 0.0, %v1732
        %v1734 = vpop.f32.mrb[0].mxu0
        %1735 = vmatprep.mubr.f32.mxu0 0.0
        %1736 = vmatmul.mubr.f32.gmra.mrb[0].mxu0 %v283
        %v1737 = vpop.f32.mrb[0].mxu0
        %v1738 = vadd.f32 0.0, %v1737
        %v1739 = vpop.f32.mrb[0].mxu0
        %1740 = vmatprep.mubr.f32.mxu0 0.0
        %1741 = vmatmul.mubr.f32.gmra.mrb[0].mxu0 %v284
        %v1742 = vpop.f32.mrb[0].mxu0
        %v1743 = vadd.f32 0.0, %v1742
        %v1744 = vpop.f32.mrb[0].mxu0
        %1745 = vmatprep.mubr.f32.mxu0 0.0
        %1746 = vmatmul.mubr.f32.gmra.mrb[0].mxu0 %v285
        %v1747 = vpop.f32.mrb[0].mxu0
        %v1748 = vadd.f32 0.0, %v1747
        %v1749 = vpop.f32.mrb[0].mxu0
        %1750 = vdwg.mxu0
        %1751 = vmatprep.subr.mxu0 0.0
        %1752 = vmatpush1.msra.mxu0 %v1614
        %1753 = vmatprep.subr.mxu0 0.0
        %1754 = vmatpush1.msra.mxu0 %v1615
        %1755 = vmatprep.subr.mxu0 0.0
        %1756 = vmatpush1.msra.mxu0 %v1616
        %1757 = vmatprep.subr.mxu0 0.0
        %1758 = vmatpush1.msra.mxu0 %v1617
        %1759 = vmatprep.subr.mxu0 0.0
        %1760 = vmatpush1.msra.mxu0 %v1618
        %1761 = vmatprep.subr.mxu0 0.0
        %1762 = vmatpush1.msra.mxu0 %v1619
        %1763 = vmatprep.subr.mxu0 0.0
        %1764 = vmatpush1.msra.mxu0 %v1620
        %1765 = vmatprep.subr.mxu0 0.0
        %1766 = vmatpush1.msra.mxu0 %v1621
        %1767 = vmatprep.subr.mxu0 0.0
        %1768 = vmatpush1.msra.mxu0 %v1622
        %1769 = vmatprep.subr.mxu0 0.0
        %1770 = vmatpush1.msra.mxu0 %v1623
        %1771 = vmatprep.subr.mxu0 0.0
        %1772 = vmatpush1.msra.mxu0 %v1624
        %1773 = vmatprep.subr.mxu0 0.0
        %1774 = vmatpush1.msra.mxu0 %v1625
        %1775 = vmatprep.subr.mxu0 0.0
        %1776 = vmatpush1.msra.mxu0 %v1626
        %1777 = vmatprep.subr.mxu0 0.0
        %1778 = vmatpush1.msra.mxu0 %v1627
        %1779 = vmatprep.subr.mxu0 0.0
        %1780 = vmatpush1.msra.mxu0 %v1628
        %1781 = vmatprep.subr.mxu0 0.0
        %1782 = vmatpush1.msra.mxu0 %v1629
        %1783 = vmatprep.subr.mxu0 0.0
        %1784 = vmatpush1.msra.mxu0 0.0
        %1785 = vmatprep.subr.mxu0 0.0
        %1786 = vmatpush1.msra.mxu0 0.0
        %1787 = vmatprep.subr.mxu0 0.0
        %1788 = vmatpush1.msra.mxu0 0.0
        %1789 = vmatprep.subr.mxu0 0.0
        %1790 = vmatpush1.msra.mxu0 0.0
        %1791 = vmatprep.subr.mxu0 0.0
        %1792 = vmatpush1.msra.mxu0 0.0
        %1793 = vmatprep.subr.mxu0 0.0
        %1794 = vmatpush1.msra.mxu0 0.0
        %1795 = vmatprep.subr.mxu0 0.0
        %1796 = vmatpush1.msra.mxu0 0.0
        %1797 = vmatprep.subr.mxu0 0.0
        %1798 = vmatpush1.msra.mxu0 0.0
        %1799 = vmatprep.subr.mxu0 0.0
        %1800 = vmatpush1.msra.mxu0 0.0
        %1801 = vmatprep.subr.mxu0 0.0
        %1802 = vmatpush1.msra.mxu0 0.0
        %1803 = vmatprep.subr.mxu0 0.0
        %1804 = vmatpush1.msra.mxu0 0.0
        %1805 = vmatprep.subr.mxu0 0.0
        %1806 = vmatpush1.msra.mxu0 0.0
        %1807 = vmatprep.subr.mxu0 0.0
        %1808 = vmatpush1.msra.mxu0 0.0
        %1809 = vmatprep.subr.mxu0 0.0
        %1810 = vmatpush1.msra.mxu0 0.0
        %1811 = vmatprep.subr.mxu0 0.0
        %1812 = vmatpush1.msra.mxu0 0.0
        %1813 = vmatprep.subr.mxu0 0.0
        %1814 = vmatpush1.msra.mxu0 0.0
        %1815 = vmatprep.mubr.f32.mxu0 0.0
        %1816 = vmatmul.mubr.f32.gmra.mrb[0].mxu0 %v1121
        %v1817 = vpop.f32.mrb[0].mxu0
        %v1818 = vadd.f32 %v1713, %v1817
        %v1819 = vpop.f32.mrb[0].mxu0
        %1820 = vmatprep.mubr.f32.mxu0 0.0
        %1821 = vmatmul.mubr.f32.gmra.mrb[0].mxu0 %v1191
        %v1822 = vpop.f32.mrb[0].mxu0
        %v1823 = vadd.f32 %v1718, %v1822
        %v1824 = vpop.f32.mrb[0].mxu0
        %1825 = vmatprep.mubr.f32.mxu0 0.0
        %1826 = vmatmul.mubr.f32.gmra.mrb[0].mxu0 %v1261
        %v1827 = vpop.f32.mrb[0].mxu0
        %v1828 = vadd.f32 %v1723, %v1827
        %v1829 = vpop.f32.mrb[0].mxu0
        %1830 = vmatprep.mubr.f32.mxu0 0.0
        %1831 = vmatmul.mubr.f32.gmra.mrb[0].mxu0 %v1331
        %v1832 = vpop.f32.mrb[0].mxu0
        %v1833 = vadd.f32 %v1728, %v1832
        %v1834 = vpop.f32.mrb[0].mxu0
        %1835 = vmatprep.mubr.f32.mxu0 0.0
        %1836 = vmatmul.mubr.f32.gmra.mrb[0].mxu0 %v1401
        %v1837 = vpop.f32.mrb[0].mxu0
        %v1838 = vadd.f32 %v1733, %v1837
        %v1839 = vpop.f32.mrb[0].mxu0
        %1840 = vmatprep.mubr.f32.mxu0 0.0
        %1841 = vmatmul.mubr.f32.gmra.mrb[0].mxu0 %v1471
        %v1842 = vpop.f32.mrb[0].mxu0
        %v1843 = vadd.f32 %v1738, %v1842
        %v1844 = vpop.f32.mrb[0].mxu0
        %1845 = vmatprep.mubr.f32.mxu0 0.0
        %1846 = vmatmul.mubr.f32.gmra.mrb[0].mxu0 %v1541
        %v1847 = vpop.f32.mrb[0].mxu0
        %v1848 = vadd.f32 %v1743, %v1847
        %v1849 = vpop.f32.mrb[0].mxu0
        %1850 = vmatprep.mubr.f32.mxu0 0.0
        %1851 = vmatmul.mubr.f32.gmra.mrb[0].mxu0 %v1611
        %v1852 = vpop.f32.mrb[0].mxu0
        %v1853 = vadd.f32 %v1748, %v1852
        %v1854 = vpop.f32.mrb[0].mxu0
        %1855 = vdwg.mxu0
        %v1856 = vtanh.pop %v1818
        %v1857 = vtanh.pop %v1823
        %v1858 = vtanh.pop %v1828
        %v1859 = vtanh.pop %v1833
        %v1860 = vtanh.pop %v1838
        %v1861 = vtanh.pop %v1843
        %v1862 = vtanh.pop %v1848
        %v1863 = vtanh.pop %v1853
        %v1864 = vcombine.low %v1856, %v1858
        %v1865 = vcombine.high %v1856, %v1858
        %v1867 = vunpack.c.l.s4 1983009808
        %v1868 = vunpack.c.0.s8 %v1867
        %v1869 = vlaneseq
        %v1870 = vshrl.u32 %v1869, 7
        %v1871 = vsub.s32 %v1868, %v1870
        %v1872 = vrot.slane %v1864, %v1871
        %v1874 = vunpack.c.l.s4 1983009808
        %v1875 = vunpack.c.0.s8 %v1874
        %v1876 = vlaneseq
        %v1877 = vshrl.u32 %v1876, 7
        %v1878 = vsub.s32 %v1875, %v1877
        %v1879 = vrot.slane %v1865, %v1878
        %v1880 = vcombine.low %v1857, %v1859
        %v1881 = vcombine.high %v1857, %v1859
        %v1883 = vunpack.c.l.s4 1983009808
        %v1884 = vunpack.c.0.s8 %v1883
        %v1885 = vlaneseq
        %v1886 = vshrl.u32 %v1885, 7
        %v1887 = vsub.s32 %v1884, %v1886
        %v1888 = vrot.slane %v1880, %v1887
        %v1890 = vunpack.c.l.s4 1983009808
        %v1891 = vunpack.c.0.s8 %v1890
        %v1892 = vlaneseq
        %v1893 = vshrl.u32 %v1892, 7
        %v1894 = vsub.s32 %v1891, %v1893
        %v1895 = vrot.slane %v1881, %v1894
        %v1896 = vcombine.low %v1860, %v1862
        %v1897 = vcombine.high %v1860, %v1862
        %v1899 = vunpack.c.l.s4 1983009808
        %v1900 = vunpack.c.0.s8 %v1899
        %v1901 = vlaneseq
        %v1902 = vshrl.u32 %v1901, 7
        %v1903 = vsub.s32 %v1900, %v1902
        %v1904 = vrot.slane %v1896, %v1903
        %v1906 = vunpack.c.l.s4 1983009808
        %v1907 = vunpack.c.0.s8 %v1906
        %v1908 = vlaneseq
        %v1909 = vshrl.u32 %v1908, 7
        %v1910 = vsub.s32 %v1907, %v1909
        %v1911 = vrot.slane %v1897, %v1910
        %v1912 = vcombine.low %v1861, %v1863
        %v1913 = vcombine.high %v1861, %v1863
        %v1915 = vunpack.c.l.s4 1983009808
        %v1916 = vunpack.c.0.s8 %v1915
        %v1917 = vlaneseq
        %v1918 = vshrl.u32 %v1917, 7
        %v1919 = vsub.s32 %v1916, %v1918
        %v1920 = vrot.slane %v1912, %v1919
        %v1922 = vunpack.c.l.s4 1983009808
        %v1923 = vunpack.c.0.s8 %v1922
        %v1924 = vlaneseq
        %v1925 = vshrl.u32 %v1924, 7
        %v1926 = vsub.s32 %v1923, %v1925
        %v1927 = vrot.slane %v1913, %v1926
        %v1928 = vcombine.low %v1872, %v1888
        %v1929 = vcombine.high %v1872, %v1888
        %v1931 = vunpack.c.l.s4 1934713408
        %v1932 = vunpack.c.0.s8 %v1931
        %v1933 = vlaneseq
        %v1934 = vshrl.u32 %v1933, 7
        %v1935 = vsub.s32 %v1932, %v1934
        %v1936 = vrot.slane %v1928, %v1935
        %v1938 = vunpack.c.l.s4 1934713408
        %v1939 = vunpack.c.0.s8 %v1938
        %v1940 = vlaneseq
        %v1941 = vshrl.u32 %v1940, 7
        %v1942 = vsub.s32 %v1939, %v1941
        %v1943 = vrot.slane %v1929, %v1942
        %v1944 = vcombine.low %v1879, %v1895
        %v1945 = vcombine.high %v1879, %v1895
        %v1947 = vunpack.c.l.s4 1934713408
        %v1948 = vunpack.c.0.s8 %v1947
        %v1949 = vlaneseq
        %v1950 = vshrl.u32 %v1949, 7
        %v1951 = vsub.s32 %v1948, %v1950
        %v1952 = vrot.slane %v1944, %v1951
        %v1954 = vunpack.c.l.s4 1934713408
        %v1955 = vunpack.c.0.s8 %v1954
        %v1956 = vlaneseq
        %v1957 = vshrl.u32 %v1956, 7
        %v1958 = vsub.s32 %v1955, %v1957
        %v1959 = vrot.slane %v1945, %v1958
        %v1960 = vcombine.low %v1904, %v1920
        %v1961 = vcombine.high %v1904, %v1920
        %v1963 = vunpack.c.l.s4 1934713408
        %v1964 = vunpack.c.0.s8 %v1963
        %v1965 = vlaneseq
        %v1966 = vshrl.u32 %v1965, 7
        %v1967 = vsub.s32 %v1964, %v1966
        %v1968 = vrot.slane %v1960, %v1967
        %v1970 = vunpack.c.l.s4 1934713408
        %v1971 = vunpack.c.0.s8 %v1970
        %v1972 = vlaneseq
        %v1973 = vshrl.u32 %v1972, 7
        %v1974 = vsub.s32 %v1971, %v1973
        %v1975 = vrot.slane %v1961, %v1974
        %v1976 = vcombine.low %v1911, %v1927
        %v1977 = vcombine.high %v1911, %v1927
        %v1979 = vunpack.c.l.s4 1934713408
        %v1980 = vunpack.c.0.s8 %v1979
        %v1981 = vlaneseq
        %v1982 = vshrl.u32 %v1981, 7
        %v1983 = vsub.s32 %v1980, %v1982
        %v1984 = vrot.slane %v1976, %v1983
        %v1986 = vunpack.c.l.s4 1934713408
        %v1987 = vunpack.c.0.s8 %v1986
        %v1988 = vlaneseq
        %v1989 = vshrl.u32 %v1988, 7
        %v1990 = vsub.s32 %v1987, %v1989
        %v1991 = vrot.slane %v1977, %v1990
        %v1992 = vcombine.low %v1936, %v1968
        %v1993 = vcombine.high %v1936, %v1968
        %v1994 = vcombine.low %v1943, %v1975
        %v1995 = vcombine.high %v1943, %v1975
        %v1996 = vcombine.low %v1952, %v1984
        %v1997 = vcombine.high %v1952, %v1984
        %v1998 = vcombine.low %v1959, %v1991
        %v1999 = vcombine.high %v1959, %v1991
        %2000 = vst [vmem:[%s263] sm:$0xff] %v1992
        %2001 = vst [vmem:[%s263 + $0x8] sm:$0xff] %v1993
        %2002 = vst [vmem:[%s263 + $0x10] sm:$0xff] %v1994
        %2003 = vst [vmem:[%s263 + $0x18] sm:$0xff] %v1995
        %2004 = vst [vmem:[%s263 + $0x20] sm:$0xff] %v1996
        %2005 = vst [vmem:[%s263 + $0x28] sm:$0xff] %v1997
        %2006 = vst [vmem:[%s263 + $0x30] sm:$0xff] %v1998
        %2007 = vst [vmem:[%s263 + $0x38] sm:$0xff] %v1999
        %v2008 = vcombine.low %v1046, %v1048
        %v2009 = vcombine.high %v1046, %v1048
        %v2011 = vunpack.c.l.s4 1983009808
        %v2012 = vunpack.c.0.s8 %v2011
        %v2013 = vlaneseq
        %v2014 = vshrl.u32 %v2013, 7
        %v2015 = vsub.s32 %v2012, %v2014
        %v2016 = vrot.slane %v2008, %v2015
        %v2018 = vunpack.c.l.s4 1983009808
        %v2019 = vunpack.c.0.s8 %v2018
        %v2020 = vlaneseq
        %v2021 = vshrl.u32 %v2020, 7
        %v2022 = vsub.s32 %v2019, %v2021
        %v2023 = vrot.slane %v2009, %v2022
        %v2024 = vcombine.low %v1047, %v1049
        %v2025 = vcombine.high %v1047, %v1049
        %v2027 = vunpack.c.l.s4 1983009808
        %v2028 = vunpack.c.0.s8 %v2027
        %v2029 = vlaneseq
        %v2030 = vshrl.u32 %v2029, 7
        %v2031 = vsub.s32 %v2028, %v2030
        %v2032 = vrot.slane %v2024, %v2031
        %v2034 = vunpack.c.l.s4 1983009808
        %v2035 = vunpack.c.0.s8 %v2034
        %v2036 = vlaneseq
        %v2037 = vshrl.u32 %v2036, 7
        %v2038 = vsub.s32 %v2035, %v2037
        %v2039 = vrot.slane %v2025, %v2038
        %v2040 = vcombine.low %v1050, %v1052
        %v2041 = vcombine.high %v1050, %v1052
        %v2043 = vunpack.c.l.s4 1983009808
        %v2044 = vunpack.c.0.s8 %v2043
        %v2045 = vlaneseq
        %v2046 = vshrl.u32 %v2045, 7
        %v2047 = vsub.s32 %v2044, %v2046
        %v2048 = vrot.slane %v2040, %v2047
        %v2050 = vunpack.c.l.s4 1983009808
        %v2051 = vunpack.c.0.s8 %v2050
        %v2052 = vlaneseq
        %v2053 = vshrl.u32 %v2052, 7
        %v2054 = vsub.s32 %v2051, %v2053
        %v2055 = vrot.slane %v2041, %v2054
        %v2056 = vcombine.low %v1051, %v1053
        %v2057 = vcombine.high %v1051, %v1053
        %v2059 = vunpack.c.l.s4 1983009808
        %v2060 = vunpack.c.0.s8 %v2059
        %v2061 = vlaneseq
        %v2062 = vshrl.u32 %v2061, 7
        %v2063 = vsub.s32 %v2060, %v2062
        %v2064 = vrot.slane %v2056, %v2063
        %v2066 = vunpack.c.l.s4 1983009808
        %v2067 = vunpack.c.0.s8 %v2066
        %v2068 = vlaneseq
        %v2069 = vshrl.u32 %v2068, 7
        %v2070 = vsub.s32 %v2067, %v2069
        %v2071 = vrot.slane %v2057, %v2070
        %v2072 = vcombine.low %v2016, %v2032
        %v2073 = vcombine.high %v2016, %v2032
        %v2075 = vunpack.c.l.s4 1934713408
        %v2076 = vunpack.c.0.s8 %v2075
        %v2077 = vlaneseq
        %v2078 = vshrl.u32 %v2077, 7
        %v2079 = vsub.s32 %v2076, %v2078
        %v2080 = vrot.slane %v2072, %v2079
        %v2082 = vunpack.c.l.s4 1934713408
        %v2083 = vunpack.c.0.s8 %v2082
        %v2084 = vlaneseq
        %v2085 = vshrl.u32 %v2084, 7
        %v2086 = vsub.s32 %v2083, %v2085
        %v2087 = vrot.slane %v2073, %v2086
        %v2088 = vcombine.low %v2023, %v2039
        %v2089 = vcombine.high %v2023, %v2039
        %v2091 = vunpack.c.l.s4 1934713408
        %v2092 = vunpack.c.0.s8 %v2091
        %v2093 = vlaneseq
        %v2094 = vshrl.u32 %v2093, 7
        %v2095 = vsub.s32 %v2092, %v2094
        %v2096 = vrot.slane %v2088, %v2095
        %v2098 = vunpack.c.l.s4 1934713408
        %v2099 = vunpack.c.0.s8 %v2098
        %v2100 = vlaneseq
        %v2101 = vshrl.u32 %v2100, 7
        %v2102 = vsub.s32 %v2099, %v2101
        %v2103 = vrot.slane %v2089, %v2102
        %v2104 = vcombine.low %v2048, %v2064
        %v2105 = vcombine.high %v2048, %v2064
        %v2107 = vunpack.c.l.s4 1934713408
        %v2108 = vunpack.c.0.s8 %v2107
        %v2109 = vlaneseq
        %v2110 = vshrl.u32 %v2109, 7
        %v2111 = vsub.s32 %v2108, %v2110
        %v2112 = vrot.slane %v2104, %v2111
        %v2114 = vunpack.c.l.s4 1934713408
        %v2115 = vunpack.c.0.s8 %v2114
        %v2116 = vlaneseq
        %v2117 = vshrl.u32 %v2116, 7
        %v2118 = vsub.s32 %v2115, %v2117
        %v2119 = vrot.slane %v2105, %v2118
        %v2120 = vcombine.low %v2055, %v2071
        %v2121 = vcombine.high %v2055, %v2071
        %v2123 = vunpack.c.l.s4 1934713408
        %v2124 = vunpack.c.0.s8 %v2123
        %v2125 = vlaneseq
        %v2126 = vshrl.u32 %v2125, 7
        %v2127 = vsub.s32 %v2124, %v2126
        %v2128 = vrot.slane %v2120, %v2127
        %v2130 = vunpack.c.l.s4 1934713408
        %v2131 = vunpack.c.0.s8 %v2130
        %v2132 = vlaneseq
        %v2133 = vshrl.u32 %v2132, 7
        %v2134 = vsub.s32 %v2131, %v2133
        %v2135 = vrot.slane %v2121, %v2134
        %v2136 = vcombine.low %v2080, %v2112
        %v2137 = vcombine.high %v2080, %v2112
        %v2138 = vcombine.low %v2087, %v2119
        %v2139 = vcombine.high %v2087, %v2119
        %v2140 = vcombine.low %v2096, %v2128
        %v2141 = vcombine.high %v2096, %v2128
        %v2142 = vcombine.low %v2103, %v2135
        %v2143 = vcombine.high %v2103, %v2135
        %2144 = vst [vmem:[%s270] sm:$0xff] %v2136
        %2145 = vst [vmem:[%s270 + $0x8] sm:$0xff] %v2137
        %2146 = vst [vmem:[%s270 + $0x10] sm:$0xff] %v2138
        %2147 = vst [vmem:[%s270 + $0x18] sm:$0xff] %v2139
        %2148 = vst [vmem:[%s270 + $0x20] sm:$0xff] %v2140
        %2149 = vst [vmem:[%s270 + $0x28] sm:$0xff] %v2141
        %2150 = vst [vmem:[%s270 + $0x30] sm:$0xff] %v2142
        %2151 = vst [vmem:[%s270 + $0x38] sm:$0xff] %v2143
        %s2152 = sand.u32 %s128, 1
        %s2153 = scalar_lea.sflag [#allocation4], %s2152
        %s2154 = sand.u32 %s128, 1
        %s2155 = smul.addr %s2154, 64
        %s2156 = scalar_lea.vmem [#allocation5], %s2155
        %s2157 = sand.u32 %s154, 1
        %s2158 = scalar_lea.sflag [#allocation7], %s2157
        %s2159 = sand.u32 %s154, 1
        %s2160 = smul.addr %s2159, 64
        %s2161 = scalar_lea.vmem [#allocation6], %s2160
        // Predicated region
        $region41: #{global_attention_dot.1} parent=35 // pred_check
          %p2162 = pneg %p138
        $region42: #{global_attention_dot.1} parent=35 // pred_check_branch
          %2164 = sbr.rel (%p2162) target = $region44
        $region43: #{global_attention_dot.1} parent=35 // pred_region
          %s2166 = ssub.s32 1024, 1024
          %2167 = vsyncadd %s2153, %s2166
          %s2168 = smul.addr %s26, 128
          %s2169 = scalar_lea.hbm %s4, %s2168
          %s2170 = sshll.u32 %s2156, 4
          %s2171 = int_to_ptr.vmem [resolvable:$true] %s2170
          %2176 = dma.vmem_to_hbm [thread:$0]  %s2171, 1024, %s2169, %s2153, 128, 256, 8
        $region44: #{global_attention_dot.1} parent=35 // pred_fallthru
          _
        // Predicated region
        $region45: #{global_attention_dot.1} parent=35 // pred_check
          %p2177 = pneg %p164
        $region46: #{global_attention_dot.1} parent=35 // pred_check_branch
          %2179 = sbr.rel (%p2177) target = $region48
        $region47: #{global_attention_dot.1} parent=35 // pred_region
          %s2181 = ssub.s32 1024, 1024
          %2182 = vsyncadd %s2158, %s2181
          %s2183 = smul.addr %s26, 128
          %s2184 = scalar_lea.hbm %s5, %s2183
          %s2185 = sshll.u32 %s2161, 4
          %s2186 = int_to_ptr.vmem [resolvable:$true] %s2185
          %2191 = dma.vmem_to_hbm [thread:$0]  %s2186, 1024, %s2184, %s2158, 128, 256, 8
        $region48: #{global_attention_dot.1} parent=35 // pred_fallthru
          _
      $region36: #{global_attention_dot.1} parent=5 // pred_fallthru
        _
      %p2192 = scmp.le.s32.totalorder 2, %s21
      // Predicated region
      $region49: #{global_attention_dot.1} parent=5 // pred_check
        %p2193 = pneg %p2192
      $region50: #{global_attention_dot.1} parent=5 // pred_check_branch
        %2195 = sbr.rel (%p2193) target = $region52
      $region51: #{global_attention_dot.1} parent=5 // pred_region
        %s2196 = ssub.s32 %s21, 2
        // Predicated region
        $region53: #{global_attention_dot.1} parent=51 // pred_check
          %p2197 = pneg %p144
        $region54: #{global_attention_dot.1} parent=51 // pred_check_branch
          %2199 = sbr.rel (%p2197) target = $region56
        $region55: #{global_attention_dot.1} parent=51 // pred_region
          %s2200 = sand.u32 %s129, 1
          %s2201 = scalar_lea.sflag [#allocation4], %s2200
          %s2202 = sand.u32 %s129, 1
          %s2203 = smul.addr %s2202, 64
          %s2204 = scalar_lea.vmem [#allocation5], %s2203
          %2205 = dma.done %s2201, 1024
        $region56: #{global_attention_dot.1} parent=51 // pred_fallthru
          _
        // Predicated region
        $region57: #{global_attention_dot.1} parent=51 // pred_check
          %p2206 = pneg %p170
        $region58: #{global_attention_dot.1} parent=51 // pred_check_branch
          %2208 = sbr.rel (%p2206) target = $region60
        $region59: #{global_attention_dot.1} parent=51 // pred_region
          %s2209 = sand.u32 %s155, 1
          %s2210 = scalar_lea.sflag [#allocation7], %s2209
          %s2211 = sand.u32 %s155, 1
          %s2212 = smul.addr %s2211, 64
          %s2213 = scalar_lea.vmem [#allocation6], %s2212
          %2214 = dma.done %s2210, 1024
        $region60: #{global_attention_dot.1} parent=51 // pred_fallthru
          _
      $region52: #{global_attention_dot.1} parent=5 // pred_fallthru
        _
    $region6: #{global_attention_dot.1} parent=1 // loop_footer
      %s25 = sadd.s32 1, %s21
    $region7: #{global_attention_dot.1} parent=1 // loop_footer_branch
      %20 = sbr.rel target = $region3
    $region8: #{global_attention_dot.1} parent=1 // loop_exit
      _
    %2215 = vsyncpa [#allocation3], 1
    %s2216 = scalar_lea.sflag [#allocation3], 1
    %2217 = vsyncpa %s2216, 1
    %2218 = vsyncpa [#allocation4], 1
    %s2219 = scalar_lea.sflag [#allocation4], 1
    %2220 = vsyncpa %s2219, 1
    %2221 = vsyncpa [#allocation7], 1
    %s2222 = scalar_lea.sflag [#allocation7], 1
    %2223 = vsyncpa %s2222, 1

</llo_original>
